<compile_context>
chip_gen: v5e
topology: v5e:2x2
jax: 0.10.0
libtpu: 0.0.40
codegen_flags: <defaults>
</compile_context>

<pallas_src>
import jax
import jax.numpy as jnp
from jax.experimental import pallas as pl
from jax.experimental.pallas import tpu as pltpu


def _fused_lstm_kernel(x_ref, w1x_ref, b1_ref, ws_ref, w2h_ref, b2_ref,
                       wfc_ref, bfc_ref, o_ref):
    T, B, D = x_ref.shape
    H = w2h_ref.shape[0]
    G = 4 * H

    # Layer-1 input projection for all timesteps in one batched matmul (off the serial
    # recurrent path); combined bias folded in. Time-major -> xp[t] is a static pick.
    x2d = x_ref[...].reshape(T * B, D)                       # layout-preserving collapse
    xp = (jnp.dot(x2d, w1x_ref[...], preferred_element_type=jnp.float32)
          + b1_ref[...]).reshape(T, B, G)

    ws = ws_ref[...]                                         # (H, 8H) = [W_hh1^T | W_ih2^T]
    w2h = w2h_ref[...]                                       # (H, 4H) = W_hh2^T
    # Hoist the layer-2 bias broadcast out of the unrolled loop (JAX does not CSE it).
    b2 = jnp.broadcast_to(b2_ref[...], (B, G))

    def gate_update(gates, c):
        # One sigmoid over the whole (B, 4H) lane-dense gate vreg; g-gate tanh derived
        # via tanh(x) = 2*sigmoid(2x) - 1 (the *2 is pre-folded into weights/bias).
        sig = jax.nn.sigmoid(gates)
        i_g = sig[:, 0 * H:1 * H]
        f_g = sig[:, 1 * H:2 * H]
        g_g = 2.0 * sig[:, 2 * H:3 * H] - 1.0
        o_g = sig[:, 3 * H:4 * H]
        c_new = f_g * c + i_g * g_g
        h_new = o_g * jnp.tanh(c_new)
        return h_new, c_new

    zeros = jnp.zeros((B, H), jnp.float32)
    c1, c2 = zeros, zeros
    h2 = zeros
    # h1(t-1) @ [W_hh1^T | W_ih2^T]  (h1(-1) = 0)
    h1proj = jnp.zeros((B, 2 * G), jnp.float32)
    # h2(t-1) @ W_hh2^T with b2 folded in  (h2(-1) = 0)
    rec2 = b2

    # Fully unrolled in-kernel time loop: serial recurrence, everything stays in vregs.
    for t in range(T):
        # Layer 1 at step t: input projection precomputed, recurrent part from h1proj.
        g1 = xp[t] + h1proj[:, :G]
        h1, c1 = gate_update(g1, c1)
        # Single (B,H)x(H,8H) matmul: first 4H cols feed layer-1 at t+1, last 4H cols
        # feed layer-2 at t. Fills the 256-wide MXU on v6e/v7x in one pass.
        h1proj = jnp.dot(h1, ws, preferred_element_type=jnp.float32)
        # Layer 2 at step t (rec2 already contains h2(t-1) @ W_hh2^T + b2).
        g2 = h1proj[:, G:] + rec2
        h2, c2 = gate_update(g2, c2)
        if t + 1 < T:
            # Depends only on h2(t): issued a step early, off the critical layer-1 chain.
            rec2 = jnp.dot(h2, w2h, preferred_element_type=jnp.float32) + b2

    # FC head as VPU mul + lane reduction (wfc is a (1, H) row) — no N=1 MXU pass.
    o_ref[...] = (jnp.sum(h2 * wfc_ref[...], axis=-1, keepdims=True)
                  + bfc_ref[...]).astype(o_ref.dtype)


def _lstm_model_forward_impl(x, packed):
    """x: (batch, seq, input_size) batch-first, like PyTorch. Returns (batch, 1)."""
    B, T, D = x.shape
    Bp = ((B + 7) // 8) * 8                      # pad batch to a full 8-sublane vreg
    x_tm = jnp.swapaxes(x, 0, 1)                 # time-major (T, B, D), done outside kernel
    if Bp != B:
        x_tm = jnp.pad(x_tm, ((0, 0), (0, Bp - B), (0, 0)))
    vmem = pl.BlockSpec(memory_space=pltpu.MemorySpace.VMEM)
    out = pl.pallas_call(
        _fused_lstm_kernel,
        out_shape=jax.ShapeDtypeStruct((Bp, 1), jnp.float32),
        in_specs=[vmem] * 8,
        out_specs=vmem,
    )(x_tm, packed["w1x"], packed["b1"], packed["ws"], packed["w2h"],
      packed["b2"], packed["wfc"], packed["bfc"])
    return out[:B]


lstm_model_forward = jax.jit(_lstm_model_forward_impl)


def _scale_g_cols(m, H):
    """Scale the g-gate columns [2H:3H] of a (..., 4H) matrix/vector by 2 so the kernel's
    tanh(x) = 2*sigmoid(2x) - 1 trick needs no extra multiply on the pre-activation."""
    return m.at[..., 2 * H:3 * H].multiply(2.0)


def pack_params(params):
    """One-time host-side weight repack: transpose, sum biases, stack layer-2 input
    weights next to layer-1 recurrent weights, pre-scale g-gate columns by 2."""
    assert len(params["lstm"]) == 2, "fused kernel is written for num_layers=2"
    (w_ih0, w_hh0, b_ih0, b_hh0), (w_ih1, w_hh1, b_ih1, b_hh1) = params["lstm"]
    H = w_hh0.shape[1]
    w1x = _scale_g_cols(jnp.asarray(w_ih0.T), H)                       # (D, 4H)
    b1 = _scale_g_cols((b_ih0 + b_hh0).reshape(1, 4 * H), H)           # (1, 4H)
    w1h = _scale_g_cols(jnp.asarray(w_hh0.T), H)                       # (H, 4H)
    w2x = _scale_g_cols(jnp.asarray(w_ih1.T), H)                       # (H, 4H)
    w2h = _scale_g_cols(jnp.asarray(w_hh1.T), H)                       # (H, 4H)
    b2 = _scale_g_cols((b_ih1 + b_hh1).reshape(1, 4 * H), H)           # (1, 4H)
    return {
        "w1x": w1x,                                                    # (D, 4H)
        "b1": b1,                                                      # (1, 4H)
        "ws": jnp.concatenate([w1h, w2x], axis=1),                     # (H, 8H)
        "w2h": w2h,                                                    # (H, 4H)
        "b2": b2,                                                      # (1, 4H)
        "wfc": jnp.asarray(params["fc_w"]).reshape(1, H),              # (1, H) row
        "bfc": jnp.asarray(params["fc_b"]).reshape(1, 1),              # (1, 1)
    }


def init_params(key, input_size, hidden_size, num_layers):
    """Deterministic init: same shapes / uniform(-1/sqrt(H), 1/sqrt(H)) as PyTorch."""
    bound = 1.0 / (hidden_size ** 0.5)
    lstm_params = []
    d_in = input_size
    for _ in range(num_layers):
        key, k1, k2, k3, k4 = jax.random.split(key, 5)
        w_ih = jax.random.uniform(k1, (4 * hidden_size, d_in), jnp.float32, -bound, bound)
        w_hh = jax.random.uniform(k2, (4 * hidden_size, hidden_size), jnp.float32, -bound, bound)
        b_ih = jax.random.uniform(k3, (4 * hidden_size,), jnp.float32, -bound, bound)
        b_hh = jax.random.uniform(k4, (4 * hidden_size,), jnp.float32, -bound, bound)
        lstm_params.append((w_ih, w_hh, b_ih, b_hh))
        d_in = hidden_size
    key, k5, k6 = jax.random.split(key, 3)
    fc_w = jax.random.uniform(k5, (1, hidden_size), jnp.float32, -bound, bound)
    fc_b = jax.random.uniform(k6, (1,), jnp.float32, -bound, bound)
    return {"lstm": lstm_params, "fc_w": fc_w, "fc_b": fc_b}


def _reference_forward(x, params):
    """Pure-JAX reference of the same math (standard PyTorch LSTM gate formulation)."""
    B = x.shape[0]
    h_seq = jnp.transpose(x, (1, 0, 2))
    for (w_ih, w_hh, b_ih, b_hh) in params["lstm"]:
        H = w_hh.shape[1]
        h = jnp.zeros((B, H), jnp.float32)
        c = jnp.zeros((B, H), jnp.float32)
        outs = []
        for t in range(h_seq.shape[0]):
            g = h_seq[t] @ w_ih.T + h @ w_hh.T + b_ih + b_hh
            i_g = jax.nn.sigmoid(g[:, 0 * H:1 * H])
            f_g = jax.nn.sigmoid(g[:, 1 * H:2 * H])
            g_g = jnp.tanh(g[:, 2 * H:3 * H])
            o_g = jax.nn.sigmoid(g[:, 3 * H:4 * H])
            c = f_g * c + i_g * g_g
            h = o_g * jnp.tanh(c)
            outs.append(h)
        h_seq = jnp.stack(outs, axis=0)
    return h_seq[-1] @ params["fc_w"].T + params["fc_b"]


if __name__ == "__main__":
    batch, seq_len, input_size, hidden_size, num_layers = 2, 8, 16, 32, 2

    key = jax.random.PRNGKey(0)
    key, kx = jax.random.split(key)
    x = jax.random.normal(kx, (batch, seq_len, input_size), jnp.float32)
    params = init_params(key, input_size, hidden_size, num_layers)
    packed = pack_params(params)

    out = lstm_model_forward(x, packed)
    out = jax.block_until_ready(out)
    assert out.shape == (batch, 1), out.shape

    ref = jax.block_until_ready(_reference_forward(x, params))
    assert jnp.max(jnp.abs(out - ref)) < 1e-4, "mismatch vs reference"

    print("KERNEL_OK")
</pallas_src>

<mosaic_0001>
module attributes {stable_mosaic.version = 11 : i64} {
  func.func @_fused_lstm_kernel(%arg0: memref<8x8x16xf32, #tpu.memory_space<vmem>>, %arg1: memref<16x128xf32, #tpu.memory_space<vmem>>, %arg2: memref<1x128xf32, #tpu.memory_space<vmem>>, %arg3: memref<32x256xf32, #tpu.memory_space<vmem>>, %arg4: memref<32x128xf32, #tpu.memory_space<vmem>>, %arg5: memref<1x128xf32, #tpu.memory_space<vmem>>, %arg6: memref<1x32xf32, #tpu.memory_space<vmem>>, %arg7: memref<1x1xf32, #tpu.memory_space<vmem>>, %arg8: memref<8x1xf32, #tpu.memory_space<vmem>>) attributes {dimension_semantics = [], scalar_prefetch = 0 : i64, scratch_operands = 0 : i64, tpu.core_type = #tpu.core_type<tc>} {
    %c0 = arith.constant 0 : index
    %c0_0 = arith.constant 0 : index
    %c0_1 = arith.constant 0 : index
    %0 = vector.load %arg0[%c0, %c0_0, %c0_1] : memref<8x8x16xf32, #tpu.memory_space<vmem>>, vector<8x8x16xf32>
    %1 = vector.shape_cast %0 : vector<8x8x16xf32> to vector<64x16xf32>
    %c0_2 = arith.constant 0 : index
    %c0_3 = arith.constant 0 : index
    %2 = vector.load %arg1[%c0_2, %c0_3] : memref<16x128xf32, #tpu.memory_space<vmem>>, vector<16x128xf32>
    %cst = arith.constant dense<0.000000e+00> : vector<64x128xf32>
    %3 = tpu.matmul %1, %2, %cst {dimension_numbers = #tpu.dot_dimension_numbers<[1], [0], [0], [1], [0, 0, 1, 1], [], []>} : vector<64x16xf32>, vector<16x128xf32>, vector<64x128xf32> -> vector<64x128xf32>
    %c0_4 = arith.constant 0 : index
    %c0_5 = arith.constant 0 : index
    %4 = vector.load %arg2[%c0_4, %c0_5] : memref<1x128xf32, #tpu.memory_space<vmem>>, vector<1x128xf32>
    %5 = vector.broadcast %4 : vector<1x128xf32> to vector<64x128xf32>
    %6 = arith.addf %3, %5 : vector<64x128xf32>
    %7 = vector.shape_cast %6 : vector<64x128xf32> to vector<8x8x128xf32>
    %c0_6 = arith.constant 0 : index
    %c0_7 = arith.constant 0 : index
    %8 = vector.load %arg3[%c0_6, %c0_7] : memref<32x256xf32, #tpu.memory_space<vmem>>, vector<32x256xf32>
    %c0_8 = arith.constant 0 : index
    %c0_9 = arith.constant 0 : index
    %9 = vector.load %arg4[%c0_8, %c0_9] : memref<32x128xf32, #tpu.memory_space<vmem>>, vector<32x128xf32>
    %c0_10 = arith.constant 0 : index
    %c0_11 = arith.constant 0 : index
    %10 = vector.load %arg5[%c0_10, %c0_11] : memref<1x128xf32, #tpu.memory_space<vmem>>, vector<1x128xf32>
    %11 = vector.shape_cast %10 : vector<1x128xf32> to vector<1x128xf32>
    %12 = vector.broadcast %11 : vector<1x128xf32> to vector<8x128xf32>
    %cst_12 = arith.constant 0.000000e+00 : f32
    %13 = vector.broadcast %cst_12 : f32 to vector<8x32xf32>
    %cst_13 = arith.constant 0.000000e+00 : f32
    %14 = vector.broadcast %cst_13 : f32 to vector<8x256xf32>
    %15 = vector.extract_strided_slice %7 {offsets = [0, 0, 0], sizes = [1, 8, 128], strides = [1, 1, 1]} : vector<8x8x128xf32> to vector<1x8x128xf32>
    %16 = vector.shape_cast %15 : vector<1x8x128xf32> to vector<8x128xf32>
    %17 = vector.extract_strided_slice %14 {offsets = [0, 0], sizes = [8, 128], strides = [1, 1]} : vector<8x256xf32> to vector<8x128xf32>
    %18 = arith.addf %16, %17 : vector<8x128xf32>
    %19 = arith.negf %18 : vector<8x128xf32>
    %20 = math.exp %19 : vector<8x128xf32>
    %cst_14 = arith.constant 1.000000e+00 : f32
    %21 = vector.broadcast %cst_14 : f32 to vector<8x128xf32>
    %22 = arith.addf %21, %20 : vector<8x128xf32>
    %23 = arith.divf %21, %22 : vector<8x128xf32>
    %24 = vector.extract_strided_slice %23 {offsets = [0, 0], sizes = [8, 32], strides = [1, 1]} : vector<8x128xf32> to vector<8x32xf32>
    %25 = vector.extract_strided_slice %23 {offsets = [0, 32], sizes = [8, 32], strides = [1, 1]} : vector<8x128xf32> to vector<8x32xf32>
    %26 = vector.extract_strided_slice %23 {offsets = [0, 64], sizes = [8, 32], strides = [1, 1]} : vector<8x128xf32> to vector<8x32xf32>
    %cst_15 = arith.constant 2.000000e+00 : f32
    %27 = vector.broadcast %cst_15 : f32 to vector<8x32xf32>
    %28 = arith.mulf %27, %26 : vector<8x32xf32>
    %cst_16 = arith.constant 1.000000e+00 : f32
    %29 = vector.broadcast %cst_16 : f32 to vector<8x32xf32>
    %30 = arith.subf %28, %29 : vector<8x32xf32>
    %31 = vector.extract_strided_slice %23 {offsets = [0, 96], sizes = [8, 32], strides = [1, 1]} : vector<8x128xf32> to vector<8x32xf32>
    %32 = arith.mulf %25, %13 : vector<8x32xf32>
    %33 = arith.mulf %24, %30 : vector<8x32xf32>
    %34 = arith.addf %32, %33 : vector<8x32xf32>
    %35 = math.tanh %34 : vector<8x32xf32>
    %36 = arith.mulf %31, %35 : vector<8x32xf32>
    %cst_17 = arith.constant dense<0.000000e+00> : vector<8x256xf32>
    %37 = tpu.matmul %36, %8, %cst_17 {dimension_numbers = #tpu.dot_dimension_numbers<[1], [0], [0], [1], [0, 0, 1, 1], [], []>} : vector<8x32xf32>, vector<32x256xf32>, vector<8x256xf32> -> vector<8x256xf32>
    %38 = vector.extract_strided_slice %37 {offsets = [0, 128], sizes = [8, 128], strides = [1, 1]} : vector<8x256xf32> to vector<8x128xf32>
    %39 = arith.addf %38, %12 : vector<8x128xf32>
    %40 = arith.negf %39 : vector<8x128xf32>
    %41 = math.exp %40 : vector<8x128xf32>
    %cst_18 = arith.constant 1.000000e+00 : f32
    %42 = vector.broadcast %cst_18 : f32 to vector<8x128xf32>
    %43 = arith.addf %42, %41 : vector<8x128xf32>
    %44 = arith.divf %42, %43 : vector<8x128xf32>
    %45 = vector.extract_strided_slice %44 {offsets = [0, 0], sizes = [8, 32], strides = [1, 1]} : vector<8x128xf32> to vector<8x32xf32>
    %46 = vector.extract_strided_slice %44 {offsets = [0, 32], sizes = [8, 32], strides = [1, 1]} : vector<8x128xf32> to vector<8x32xf32>
    %47 = vector.extract_strided_slice %44 {offsets = [0, 64], sizes = [8, 32], strides = [1, 1]} : vector<8x128xf32> to vector<8x32xf32>
    %cst_19 = arith.constant 2.000000e+00 : f32
    %48 = vector.broadcast %cst_19 : f32 to vector<8x32xf32>
    %49 = arith.mulf %48, %47 : vector<8x32xf32>
    %cst_20 = arith.constant 1.000000e+00 : f32
    %50 = vector.broadcast %cst_20 : f32 to vector<8x32xf32>
    %51 = arith.subf %49, %50 : vector<8x32xf32>
    %52 = vector.extract_strided_slice %44 {offsets = [0, 96], sizes = [8, 32], strides = [1, 1]} : vector<8x128xf32> to vector<8x32xf32>
    %53 = arith.mulf %46, %13 : vector<8x32xf32>
    %54 = arith.mulf %45, %51 : vector<8x32xf32>
    %55 = arith.addf %53, %54 : vector<8x32xf32>
    %56 = math.tanh %55 : vector<8x32xf32>
    %57 = arith.mulf %52, %56 : vector<8x32xf32>
    %cst_21 = arith.constant dense<0.000000e+00> : vector<8x128xf32>
    %58 = tpu.matmul %57, %9, %cst_21 {dimension_numbers = #tpu.dot_dimension_numbers<[1], [0], [0], [1], [0, 0, 1, 1], [], []>} : vector<8x32xf32>, vector<32x128xf32>, vector<8x128xf32> -> vector<8x128xf32>
    %59 = arith.addf %58, %12 : vector<8x128xf32>
    %60 = vector.extract_strided_slice %7 {offsets = [1, 0, 0], sizes = [1, 8, 128], strides = [1, 1, 1]} : vector<8x8x128xf32> to vector<1x8x128xf32>
    %61 = vector.shape_cast %60 : vector<1x8x128xf32> to vector<8x128xf32>
    %62 = vector.extract_strided_slice %37 {offsets = [0, 0], sizes = [8, 128], strides = [1, 1]} : vector<8x256xf32> to vector<8x128xf32>
    %63 = arith.addf %61, %62 : vector<8x128xf32>
    %64 = arith.negf %63 : vector<8x128xf32>
    %65 = math.exp %64 : vector<8x128xf32>
    %cst_22 = arith.constant 1.000000e+00 : f32
    %66 = vector.broadcast %cst_22 : f32 to vector<8x128xf32>
    %67 = arith.addf %66, %65 : vector<8x128xf32>
    %68 = arith.divf %66, %67 : vector<8x128xf32>
    %69 = vector.extract_strided_slice %68 {offsets = [0, 0], sizes = [8, 32], strides = [1, 1]} : vector<8x128xf32> to vector<8x32xf32>
    %70 = vector.extract_strided_slice %68 {offsets = [0, 32], sizes = [8, 32], strides = [1, 1]} : vector<8x128xf32> to vector<8x32xf32>
    %71 = vector.extract_strided_slice %68 {offsets = [0, 64], sizes = [8, 32], strides = [1, 1]} : vector<8x128xf32> to vector<8x32xf32>
    %cst_23 = arith.constant 2.000000e+00 : f32
    %72 = vector.broadcast %cst_23 : f32 to vector<8x32xf32>
    %73 = arith.mulf %72, %71 : vector<8x32xf32>
    %cst_24 = arith.constant 1.000000e+00 : f32
    %74 = vector.broadcast %cst_24 : f32 to vector<8x32xf32>
    %75 = arith.subf %73, %74 : vector<8x32xf32>
    %76 = vector.extract_strided_slice %68 {offsets = [0, 96], sizes = [8, 32], strides = [1, 1]} : vector<8x128xf32> to vector<8x32xf32>
    %77 = arith.mulf %70, %34 : vector<8x32xf32>
    %78 = arith.mulf %69, %75 : vector<8x32xf32>
    %79 = arith.addf %77, %78 : vector<8x32xf32>
    %80 = math.tanh %79 : vector<8x32xf32>
    %81 = arith.mulf %76, %80 : vector<8x32xf32>
    %cst_25 = arith.constant dense<0.000000e+00> : vector<8x256xf32>
    %82 = tpu.matmul %81, %8, %cst_25 {dimension_numbers = #tpu.dot_dimension_numbers<[1], [0], [0], [1], [0, 0, 1, 1], [], []>} : vector<8x32xf32>, vector<32x256xf32>, vector<8x256xf32> -> vector<8x256xf32>
    %83 = vector.extract_strided_slice %82 {offsets = [0, 128], sizes = [8, 128], strides = [1, 1]} : vector<8x256xf32> to vector<8x128xf32>
    %84 = arith.addf %83, %59 : vector<8x128xf32>
    %85 = arith.negf %84 : vector<8x128xf32>
    %86 = math.exp %85 : vector<8x128xf32>
    %cst_26 = arith.constant 1.000000e+00 : f32
    %87 = vector.broadcast %cst_26 : f32 to vector<8x128xf32>
    %88 = arith.addf %87, %86 : vector<8x128xf32>
    %89 = arith.divf %87, %88 : vector<8x128xf32>
    %90 = vector.extract_strided_slice %89 {offsets = [0, 0], sizes = [8, 32], strides = [1, 1]} : vector<8x128xf32> to vector<8x32xf32>
    %91 = vector.extract_strided_slice %89 {offsets = [0, 32], sizes = [8, 32], strides = [1, 1]} : vector<8x128xf32> to vector<8x32xf32>
    %92 = vector.extract_strided_slice %89 {offsets = [0, 64], sizes = [8, 32], strides = [1, 1]} : vector<8x128xf32> to vector<8x32xf32>
    %cst_27 = arith.constant 2.000000e+00 : f32
    %93 = vector.broadcast %cst_27 : f32 to vector<8x32xf32>
    %94 = arith.mulf %93, %92 : vector<8x32xf32>
    %cst_28 = arith.constant 1.000000e+00 : f32
    %95 = vector.broadcast %cst_28 : f32 to vector<8x32xf32>
    %96 = arith.subf %94, %95 : vector<8x32xf32>
    %97 = vector.extract_strided_slice %89 {offsets = [0, 96], sizes = [8, 32], strides = [1, 1]} : vector<8x128xf32> to vector<8x32xf32>
    %98 = arith.mulf %91, %55 : vector<8x32xf32>
    %99 = arith.mulf %90, %96 : vector<8x32xf32>
    %100 = arith.addf %98, %99 : vector<8x32xf32>
    %101 = math.tanh %100 : vector<8x32xf32>
    %102 = arith.mulf %97, %101 : vector<8x32xf32>
    %cst_29 = arith.constant dense<0.000000e+00> : vector<8x128xf32>
    %103 = tpu.matmul %102, %9, %cst_29 {dimension_numbers = #tpu.dot_dimension_numbers<[1], [0], [0], [1], [0, 0, 1, 1], [], []>} : vector<8x32xf32>, vector<32x128xf32>, vector<8x128xf32> -> vector<8x128xf32>
    %104 = arith.addf %103, %12 : vector<8x128xf32>
    %105 = vector.extract_strided_slice %7 {offsets = [2, 0, 0], sizes = [1, 8, 128], strides = [1, 1, 1]} : vector<8x8x128xf32> to vector<1x8x128xf32>
    %106 = vector.shape_cast %105 : vector<1x8x128xf32> to vector<8x128xf32>
    %107 = vector.extract_strided_slice %82 {offsets = [0, 0], sizes = [8, 128], strides = [1, 1]} : vector<8x256xf32> to vector<8x128xf32>
    %108 = arith.addf %106, %107 : vector<8x128xf32>
    %109 = arith.negf %108 : vector<8x128xf32>
    %110 = math.exp %109 : vector<8x128xf32>
    %cst_30 = arith.constant 1.000000e+00 : f32
    %111 = vector.broadcast %cst_30 : f32 to vector<8x128xf32>
    %112 = arith.addf %111, %110 : vector<8x128xf32>
    %113 = arith.divf %111, %112 : vector<8x128xf32>
    %114 = vector.extract_strided_slice %113 {offsets = [0, 0], sizes = [8, 32], strides = [1, 1]} : vector<8x128xf32> to vector<8x32xf32>
    %115 = vector.extract_strided_slice %113 {offsets = [0, 32], sizes = [8, 32], strides = [1, 1]} : vector<8x128xf32> to vector<8x32xf32>
    %116 = vector.extract_strided_slice %113 {offsets = [0, 64], sizes = [8, 32], strides = [1, 1]} : vector<8x128xf32> to vector<8x32xf32>
    %cst_31 = arith.constant 2.000000e+00 : f32
    %117 = vector.broadcast %cst_31 : f32 to vector<8x32xf32>
    %118 = arith.mulf %117, %116 : vector<8x32xf32>
    %cst_32 = arith.constant 1.000000e+00 : f32
    %119 = vector.broadcast %cst_32 : f32 to vector<8x32xf32>
    %120 = arith.subf %118, %119 : vector<8x32xf32>
    %121 = vector.extract_strided_slice %113 {offsets = [0, 96], sizes = [8, 32], strides = [1, 1]} : vector<8x128xf32> to vector<8x32xf32>
    %122 = arith.mulf %115, %79 : vector<8x32xf32>
    %123 = arith.mulf %114, %120 : vector<8x32xf32>
    %124 = arith.addf %122, %123 : vector<8x32xf32>
    %125 = math.tanh %124 : vector<8x32xf32>
    %126 = arith.mulf %121, %125 : vector<8x32xf32>
    %cst_33 = arith.constant dense<0.000000e+00> : vector<8x256xf32>
    %127 = tpu.matmul %126, %8, %cst_33 {dimension_numbers = #tpu.dot_dimension_numbers<[1], [0], [0], [1], [0, 0, 1, 1], [], []>} : vector<8x32xf32>, vector<32x256xf32>, vector<8x256xf32> -> vector<8x256xf32>
    %128 = vector.extract_strided_slice %127 {offsets = [0, 128], sizes = [8, 128], strides = [1, 1]} : vector<8x256xf32> to vector<8x128xf32>
    %129 = arith.addf %128, %104 : vector<8x128xf32>
    %130 = arith.negf %129 : vector<8x128xf32>
    %131 = math.exp %130 : vector<8x128xf32>
    %cst_34 = arith.constant 1.000000e+00 : f32
    %132 = vector.broadcast %cst_34 : f32 to vector<8x128xf32>
    %133 = arith.addf %132, %131 : vector<8x128xf32>
    %134 = arith.divf %132, %133 : vector<8x128xf32>
    %135 = vector.extract_strided_slice %134 {offsets = [0, 0], sizes = [8, 32], strides = [1, 1]} : vector<8x128xf32> to vector<8x32xf32>
    %136 = vector.extract_strided_slice %134 {offsets = [0, 32], sizes = [8, 32], strides = [1, 1]} : vector<8x128xf32> to vector<8x32xf32>
    %137 = vector.extract_strided_slice %134 {offsets = [0, 64], sizes = [8, 32], strides = [1, 1]} : vector<8x128xf32> to vector<8x32xf32>
    %cst_35 = arith.constant 2.000000e+00 : f32
    %138 = vector.broadcast %cst_35 : f32 to vector<8x32xf32>
    %139 = arith.mulf %138, %137 : vector<8x32xf32>
    %cst_36 = arith.constant 1.000000e+00 : f32
    %140 = vector.broadcast %cst_36 : f32 to vector<8x32xf32>
    %141 = arith.subf %139, %140 : vector<8x32xf32>
    %142 = vector.extract_strided_slice %134 {offsets = [0, 96], sizes = [8, 32], strides = [1, 1]} : vector<8x128xf32> to vector<8x32xf32>
    %143 = arith.mulf %136, %100 : vector<8x32xf32>
    %144 = arith.mulf %135, %141 : vector<8x32xf32>
    %145 = arith.addf %143, %144 : vector<8x32xf32>
    %146 = math.tanh %145 : vector<8x32xf32>
    %147 = arith.mulf %142, %146 : vector<8x32xf32>
    %cst_37 = arith.constant dense<0.000000e+00> : vector<8x128xf32>
    %148 = tpu.matmul %147, %9, %cst_37 {dimension_numbers = #tpu.dot_dimension_numbers<[1], [0], [0], [1], [0, 0, 1, 1], [], []>} : vector<8x32xf32>, vector<32x128xf32>, vector<8x128xf32> -> vector<8x128xf32>
    %149 = arith.addf %148, %12 : vector<8x128xf32>
    %150 = vector.extract_strided_slice %7 {offsets = [3, 0, 0], sizes = [1, 8, 128], strides = [1, 1, 1]} : vector<8x8x128xf32> to vector<1x8x128xf32>
    %151 = vector.shape_cast %150 : vector<1x8x128xf32> to vector<8x128xf32>
    %152 = vector.extract_strided_slice %127 {offsets = [0, 0], sizes = [8, 128], strides = [1, 1]} : vector<8x256xf32> to vector<8x128xf32>
    %153 = arith.addf %151, %152 : vector<8x128xf32>
    %154 = arith.negf %153 : vector<8x128xf32>
    %155 = math.exp %154 : vector<8x128xf32>
    %cst_38 = arith.constant 1.000000e+00 : f32
    %156 = vector.broadcast %cst_38 : f32 to vector<8x128xf32>
    %157 = arith.addf %156, %155 : vector<8x128xf32>
    %158 = arith.divf %156, %157 : vector<8x128xf32>
    %159 = vector.extract_strided_slice %158 {offsets = [0, 0], sizes = [8, 32], strides = [1, 1]} : vector<8x128xf32> to vector<8x32xf32>
    %160 = vector.extract_strided_slice %158 {offsets = [0, 32], sizes = [8, 32], strides = [1, 1]} : vector<8x128xf32> to vector<8x32xf32>
    %161 = vector.extract_strided_slice %158 {offsets = [0, 64], sizes = [8, 32], strides = [1, 1]} : vector<8x128xf32> to vector<8x32xf32>
    %cst_39 = arith.constant 2.000000e+00 : f32
    %162 = vector.broadcast %cst_39 : f32 to vector<8x32xf32>
    %163 = arith.mulf %162, %161 : vector<8x32xf32>
    %cst_40 = arith.constant 1.000000e+00 : f32
    %164 = vector.broadcast %cst_40 : f32 to vector<8x32xf32>
    %165 = arith.subf %163, %164 : vector<8x32xf32>
    %166 = vector.extract_strided_slice %158 {offsets = [0, 96], sizes = [8, 32], strides = [1, 1]} : vector<8x128xf32> to vector<8x32xf32>
    %167 = arith.mulf %160, %124 : vector<8x32xf32>
    %168 = arith.mulf %159, %165 : vector<8x32xf32>
    %169 = arith.addf %167, %168 : vector<8x32xf32>
    %170 = math.tanh %169 : vector<8x32xf32>
    %171 = arith.mulf %166, %170 : vector<8x32xf32>
    %cst_41 = arith.constant dense<0.000000e+00> : vector<8x256xf32>
    %172 = tpu.matmul %171, %8, %cst_41 {dimension_numbers = #tpu.dot_dimension_numbers<[1], [0], [0], [1], [0, 0, 1, 1], [], []>} : vector<8x32xf32>, vector<32x256xf32>, vector<8x256xf32> -> vector<8x256xf32>
    %173 = vector.extract_strided_slice %172 {offsets = [0, 128], sizes = [8, 128], strides = [1, 1]} : vector<8x256xf32> to vector<8x128xf32>
    %174 = arith.addf %173, %149 : vector<8x128xf32>
    %175 = arith.negf %174 : vector<8x128xf32>
    %176 = math.exp %175 : vector<8x128xf32>
    %cst_42 = arith.constant 1.000000e+00 : f32
    %177 = vector.broadcast %cst_42 : f32 to vector<8x128xf32>
    %178 = arith.addf %177, %176 : vector<8x128xf32>
    %179 = arith.divf %177, %178 : vector<8x128xf32>
    %180 = vector.extract_strided_slice %179 {offsets = [0, 0], sizes = [8, 32], strides = [1, 1]} : vector<8x128xf32> to vector<8x32xf32>
    %181 = vector.extract_strided_slice %179 {offsets = [0, 32], sizes = [8, 32], strides = [1, 1]} : vector<8x128xf32> to vector<8x32xf32>
    %182 = vector.extract_strided_slice %179 {offsets = [0, 64], sizes = [8, 32], strides = [1, 1]} : vector<8x128xf32> to vector<8x32xf32>
    %cst_43 = arith.constant 2.000000e+00 : f32
    %183 = vector.broadcast %cst_43 : f32 to vector<8x32xf32>
    %184 = arith.mulf %183, %182 : vector<8x32xf32>
    %cst_44 = arith.constant 1.000000e+00 : f32
    %185 = vector.broadcast %cst_44 : f32 to vector<8x32xf32>
    %186 = arith.subf %184, %185 : vector<8x32xf32>
    %187 = vector.extract_strided_slice %179 {offsets = [0, 96], sizes = [8, 32], strides = [1, 1]} : vector<8x128xf32> to vector<8x32xf32>
    %188 = arith.mulf %181, %145 : vector<8x32xf32>
    %189 = arith.mulf %180, %186 : vector<8x32xf32>
    %190 = arith.addf %188, %189 : vector<8x32xf32>
    %191 = math.tanh %190 : vector<8x32xf32>
    %192 = arith.mulf %187, %191 : vector<8x32xf32>
    %cst_45 = arith.constant dense<0.000000e+00> : vector<8x128xf32>
    %193 = tpu.matmul %192, %9, %cst_45 {dimension_numbers = #tpu.dot_dimension_numbers<[1], [0], [0], [1], [0, 0, 1, 1], [], []>} : vector<8x32xf32>, vector<32x128xf32>, vector<8x128xf32> -> vector<8x128xf32>
    %194 = arith.addf %193, %12 : vector<8x128xf32>
    %195 = vector.extract_strided_slice %7 {offsets = [4, 0, 0], sizes = [1, 8, 128], strides = [1, 1, 1]} : vector<8x8x128xf32> to vector<1x8x128xf32>
    %196 = vector.shape_cast %195 : vector<1x8x128xf32> to vector<8x128xf32>
    %197 = vector.extract_strided_slice %172 {offsets = [0, 0], sizes = [8, 128], strides = [1, 1]} : vector<8x256xf32> to vector<8x128xf32>
    %198 = arith.addf %196, %197 : vector<8x128xf32>
    %199 = arith.negf %198 : vector<8x128xf32>
    %200 = math.exp %199 : vector<8x128xf32>
    %cst_46 = arith.constant 1.000000e+00 : f32
    %201 = vector.broadcast %cst_46 : f32 to vector<8x128xf32>
    %202 = arith.addf %201, %200 : vector<8x128xf32>
    %203 = arith.divf %201, %202 : vector<8x128xf32>
    %204 = vector.extract_strided_slice %203 {offsets = [0, 0], sizes = [8, 32], strides = [1, 1]} : vector<8x128xf32> to vector<8x32xf32>
    %205 = vector.extract_strided_slice %203 {offsets = [0, 32], sizes = [8, 32], strides = [1, 1]} : vector<8x128xf32> to vector<8x32xf32>
    %206 = vector.extract_strided_slice %203 {offsets = [0, 64], sizes = [8, 32], strides = [1, 1]} : vector<8x128xf32> to vector<8x32xf32>
    %cst_47 = arith.constant 2.000000e+00 : f32
    %207 = vector.broadcast %cst_47 : f32 to vector<8x32xf32>
    %208 = arith.mulf %207, %206 : vector<8x32xf32>
    %cst_48 = arith.constant 1.000000e+00 : f32
    %209 = vector.broadcast %cst_48 : f32 to vector<8x32xf32>
    %210 = arith.subf %208, %209 : vector<8x32xf32>
    %211 = vector.extract_strided_slice %203 {offsets = [0, 96], sizes = [8, 32], strides = [1, 1]} : vector<8x128xf32> to vector<8x32xf32>
    %212 = arith.mulf %205, %169 : vector<8x32xf32>
    %213 = arith.mulf %204, %210 : vector<8x32xf32>
    %214 = arith.addf %212, %213 : vector<8x32xf32>
    %215 = math.tanh %214 : vector<8x32xf32>
    %216 = arith.mulf %211, %215 : vector<8x32xf32>
    %cst_49 = arith.constant dense<0.000000e+00> : vector<8x256xf32>
    %217 = tpu.matmul %216, %8, %cst_49 {dimension_numbers = #tpu.dot_dimension_numbers<[1], [0], [0], [1], [0, 0, 1, 1], [], []>} : vector<8x32xf32>, vector<32x256xf32>, vector<8x256xf32> -> vector<8x256xf32>
    %218 = vector.extract_strided_slice %217 {offsets = [0, 128], sizes = [8, 128], strides = [1, 1]} : vector<8x256xf32> to vector<8x128xf32>
    %219 = arith.addf %218, %194 : vector<8x128xf32>
    %220 = arith.negf %219 : vector<8x128xf32>
    %221 = math.exp %220 : vector<8x128xf32>
    %cst_50 = arith.constant 1.000000e+00 : f32
    %222 = vector.broadcast %cst_50 : f32 to vector<8x128xf32>
    %223 = arith.addf %222, %221 : vector<8x128xf32>
    %224 = arith.divf %222, %223 : vector<8x128xf32>
    %225 = vector.extract_strided_slice %224 {offsets = [0, 0], sizes = [8, 32], strides = [1, 1]} : vector<8x128xf32> to vector<8x32xf32>
    %226 = vector.extract_strided_slice %224 {offsets = [0, 32], sizes = [8, 32], strides = [1, 1]} : vector<8x128xf32> to vector<8x32xf32>
    %227 = vector.extract_strided_slice %224 {offsets = [0, 64], sizes = [8, 32], strides = [1, 1]} : vector<8x128xf32> to vector<8x32xf32>
    %cst_51 = arith.constant 2.000000e+00 : f32
    %228 = vector.broadcast %cst_51 : f32 to vector<8x32xf32>
    %229 = arith.mulf %228, %227 : vector<8x32xf32>
    %cst_52 = arith.constant 1.000000e+00 : f32
    %230 = vector.broadcast %cst_52 : f32 to vector<8x32xf32>
    %231 = arith.subf %229, %230 : vector<8x32xf32>
    %232 = vector.extract_strided_slice %224 {offsets = [0, 96], sizes = [8, 32], strides = [1, 1]} : vector<8x128xf32> to vector<8x32xf32>
    %233 = arith.mulf %226, %190 : vector<8x32xf32>
    %234 = arith.mulf %225, %231 : vector<8x32xf32>
    %235 = arith.addf %233, %234 : vector<8x32xf32>
    %236 = math.tanh %235 : vector<8x32xf32>
    %237 = arith.mulf %232, %236 : vector<8x32xf32>
    %cst_53 = arith.constant dense<0.000000e+00> : vector<8x128xf32>
    %238 = tpu.matmul %237, %9, %cst_53 {dimension_numbers = #tpu.dot_dimension_numbers<[1], [0], [0], [1], [0, 0, 1, 1], [], []>} : vector<8x32xf32>, vector<32x128xf32>, vector<8x128xf32> -> vector<8x128xf32>
    %239 = arith.addf %238, %12 : vector<8x128xf32>
    %240 = vector.extract_strided_slice %7 {offsets = [5, 0, 0], sizes = [1, 8, 128], strides = [1, 1, 1]} : vector<8x8x128xf32> to vector<1x8x128xf32>
    %241 = vector.shape_cast %240 : vector<1x8x128xf32> to vector<8x128xf32>
    %242 = vector.extract_strided_slice %217 {offsets = [0, 0], sizes = [8, 128], strides = [1, 1]} : vector<8x256xf32> to vector<8x128xf32>
    %243 = arith.addf %241, %242 : vector<8x128xf32>
    %244 = arith.negf %243 : vector<8x128xf32>
    %245 = math.exp %244 : vector<8x128xf32>
    %cst_54 = arith.constant 1.000000e+00 : f32
    %246 = vector.broadcast %cst_54 : f32 to vector<8x128xf32>
    %247 = arith.addf %246, %245 : vector<8x128xf32>
    %248 = arith.divf %246, %247 : vector<8x128xf32>
    %249 = vector.extract_strided_slice %248 {offsets = [0, 0], sizes = [8, 32], strides = [1, 1]} : vector<8x128xf32> to vector<8x32xf32>
    %250 = vector.extract_strided_slice %248 {offsets = [0, 32], sizes = [8, 32], strides = [1, 1]} : vector<8x128xf32> to vector<8x32xf32>
    %251 = vector.extract_strided_slice %248 {offsets = [0, 64], sizes = [8, 32], strides = [1, 1]} : vector<8x128xf32> to vector<8x32xf32>
    %cst_55 = arith.constant 2.000000e+00 : f32
    %252 = vector.broadcast %cst_55 : f32 to vector<8x32xf32>
    %253 = arith.mulf %252, %251 : vector<8x32xf32>
    %cst_56 = arith.constant 1.000000e+00 : f32
    %254 = vector.broadcast %cst_56 : f32 to vector<8x32xf32>
    %255 = arith.subf %253, %254 : vector<8x32xf32>
    %256 = vector.extract_strided_slice %248 {offsets = [0, 96], sizes = [8, 32], strides = [1, 1]} : vector<8x128xf32> to vector<8x32xf32>
    %257 = arith.mulf %250, %214 : vector<8x32xf32>
    %258 = arith.mulf %249, %255 : vector<8x32xf32>
    %259 = arith.addf %257, %258 : vector<8x32xf32>
    %260 = math.tanh %259 : vector<8x32xf32>
    %261 = arith.mulf %256, %260 : vector<8x32xf32>
    %cst_57 = arith.constant dense<0.000000e+00> : vector<8x256xf32>
    %262 = tpu.matmul %261, %8, %cst_57 {dimension_numbers = #tpu.dot_dimension_numbers<[1], [0], [0], [1], [0, 0, 1, 1], [], []>} : vector<8x32xf32>, vector<32x256xf32>, vector<8x256xf32> -> vector<8x256xf32>
    %263 = vector.extract_strided_slice %262 {offsets = [0, 128], sizes = [8, 128], strides = [1, 1]} : vector<8x256xf32> to vector<8x128xf32>
    %264 = arith.addf %263, %239 : vector<8x128xf32>
    %265 = arith.negf %264 : vector<8x128xf32>
    %266 = math.exp %265 : vector<8x128xf32>
    %cst_58 = arith.constant 1.000000e+00 : f32
    %267 = vector.broadcast %cst_58 : f32 to vector<8x128xf32>
    %268 = arith.addf %267, %266 : vector<8x128xf32>
    %269 = arith.divf %267, %268 : vector<8x128xf32>
    %270 = vector.extract_strided_slice %269 {offsets = [0, 0], sizes = [8, 32], strides = [1, 1]} : vector<8x128xf32> to vector<8x32xf32>
    %271 = vector.extract_strided_slice %269 {offsets = [0, 32], sizes = [8, 32], strides = [1, 1]} : vector<8x128xf32> to vector<8x32xf32>
    %272 = vector.extract_strided_slice %269 {offsets = [0, 64], sizes = [8, 32], strides = [1, 1]} : vector<8x128xf32> to vector<8x32xf32>
    %cst_59 = arith.constant 2.000000e+00 : f32
    %273 = vector.broadcast %cst_59 : f32 to vector<8x32xf32>
    %274 = arith.mulf %273, %272 : vector<8x32xf32>
    %cst_60 = arith.constant 1.000000e+00 : f32
    %275 = vector.broadcast %cst_60 : f32 to vector<8x32xf32>
    %276 = arith.subf %274, %275 : vector<8x32xf32>
    %277 = vector.extract_strided_slice %269 {offsets = [0, 96], sizes = [8, 32], strides = [1, 1]} : vector<8x128xf32> to vector<8x32xf32>
    %278 = arith.mulf %271, %235 : vector<8x32xf32>
    %279 = arith.mulf %270, %276 : vector<8x32xf32>
    %280 = arith.addf %278, %279 : vector<8x32xf32>
    %281 = math.tanh %280 : vector<8x32xf32>
    %282 = arith.mulf %277, %281 : vector<8x32xf32>
    %cst_61 = arith.constant dense<0.000000e+00> : vector<8x128xf32>
    %283 = tpu.matmul %282, %9, %cst_61 {dimension_numbers = #tpu.dot_dimension_numbers<[1], [0], [0], [1], [0, 0, 1, 1], [], []>} : vector<8x32xf32>, vector<32x128xf32>, vector<8x128xf32> -> vector<8x128xf32>
    %284 = arith.addf %283, %12 : vector<8x128xf32>
    %285 = vector.extract_strided_slice %7 {offsets = [6, 0, 0], sizes = [1, 8, 128], strides = [1, 1, 1]} : vector<8x8x128xf32> to vector<1x8x128xf32>
    %286 = vector.shape_cast %285 : vector<1x8x128xf32> to vector<8x128xf32>
    %287 = vector.extract_strided_slice %262 {offsets = [0, 0], sizes = [8, 128], strides = [1, 1]} : vector<8x256xf32> to vector<8x128xf32>
    %288 = arith.addf %286, %287 : vector<8x128xf32>
    %289 = arith.negf %288 : vector<8x128xf32>
    %290 = math.exp %289 : vector<8x128xf32>
    %cst_62 = arith.constant 1.000000e+00 : f32
    %291 = vector.broadcast %cst_62 : f32 to vector<8x128xf32>
    %292 = arith.addf %291, %290 : vector<8x128xf32>
    %293 = arith.divf %291, %292 : vector<8x128xf32>
    %294 = vector.extract_strided_slice %293 {offsets = [0, 0], sizes = [8, 32], strides = [1, 1]} : vector<8x128xf32> to vector<8x32xf32>
    %295 = vector.extract_strided_slice %293 {offsets = [0, 32], sizes = [8, 32], strides = [1, 1]} : vector<8x128xf32> to vector<8x32xf32>
    %296 = vector.extract_strided_slice %293 {offsets = [0, 64], sizes = [8, 32], strides = [1, 1]} : vector<8x128xf32> to vector<8x32xf32>
    %cst_63 = arith.constant 2.000000e+00 : f32
    %297 = vector.broadcast %cst_63 : f32 to vector<8x32xf32>
    %298 = arith.mulf %297, %296 : vector<8x32xf32>
    %cst_64 = arith.constant 1.000000e+00 : f32
    %299 = vector.broadcast %cst_64 : f32 to vector<8x32xf32>
    %300 = arith.subf %298, %299 : vector<8x32xf32>
    %301 = vector.extract_strided_slice %293 {offsets = [0, 96], sizes = [8, 32], strides = [1, 1]} : vector<8x128xf32> to vector<8x32xf32>
    %302 = arith.mulf %295, %259 : vector<8x32xf32>
    %303 = arith.mulf %294, %300 : vector<8x32xf32>
    %304 = arith.addf %302, %303 : vector<8x32xf32>
    %305 = math.tanh %304 : vector<8x32xf32>
    %306 = arith.mulf %301, %305 : vector<8x32xf32>
    %cst_65 = arith.constant dense<0.000000e+00> : vector<8x256xf32>
    %307 = tpu.matmul %306, %8, %cst_65 {dimension_numbers = #tpu.dot_dimension_numbers<[1], [0], [0], [1], [0, 0, 1, 1], [], []>} : vector<8x32xf32>, vector<32x256xf32>, vector<8x256xf32> -> vector<8x256xf32>
    %308 = vector.extract_strided_slice %307 {offsets = [0, 128], sizes = [8, 128], strides = [1, 1]} : vector<8x256xf32> to vector<8x128xf32>
    %309 = arith.addf %308, %284 : vector<8x128xf32>
    %310 = arith.negf %309 : vector<8x128xf32>
    %311 = math.exp %310 : vector<8x128xf32>
    %cst_66 = arith.constant 1.000000e+00 : f32
    %312 = vector.broadcast %cst_66 : f32 to vector<8x128xf32>
    %313 = arith.addf %312, %311 : vector<8x128xf32>
    %314 = arith.divf %312, %313 : vector<8x128xf32>
    %315 = vector.extract_strided_slice %314 {offsets = [0, 0], sizes = [8, 32], strides = [1, 1]} : vector<8x128xf32> to vector<8x32xf32>
    %316 = vector.extract_strided_slice %314 {offsets = [0, 32], sizes = [8, 32], strides = [1, 1]} : vector<8x128xf32> to vector<8x32xf32>
    %317 = vector.extract_strided_slice %314 {offsets = [0, 64], sizes = [8, 32], strides = [1, 1]} : vector<8x128xf32> to vector<8x32xf32>
    %cst_67 = arith.constant 2.000000e+00 : f32
    %318 = vector.broadcast %cst_67 : f32 to vector<8x32xf32>
    %319 = arith.mulf %318, %317 : vector<8x32xf32>
    %cst_68 = arith.constant 1.000000e+00 : f32
    %320 = vector.broadcast %cst_68 : f32 to vector<8x32xf32>
    %321 = arith.subf %319, %320 : vector<8x32xf32>
    %322 = vector.extract_strided_slice %314 {offsets = [0, 96], sizes = [8, 32], strides = [1, 1]} : vector<8x128xf32> to vector<8x32xf32>
    %323 = arith.mulf %316, %280 : vector<8x32xf32>
    %324 = arith.mulf %315, %321 : vector<8x32xf32>
    %325 = arith.addf %323, %324 : vector<8x32xf32>
    %326 = math.tanh %325 : vector<8x32xf32>
    %327 = arith.mulf %322, %326 : vector<8x32xf32>
    %cst_69 = arith.constant dense<0.000000e+00> : vector<8x128xf32>
    %328 = tpu.matmul %327, %9, %cst_69 {dimension_numbers = #tpu.dot_dimension_numbers<[1], [0], [0], [1], [0, 0, 1, 1], [], []>} : vector<8x32xf32>, vector<32x128xf32>, vector<8x128xf32> -> vector<8x128xf32>
    %329 = arith.addf %328, %12 : vector<8x128xf32>
    %330 = vector.extract_strided_slice %7 {offsets = [7, 0, 0], sizes = [1, 8, 128], strides = [1, 1, 1]} : vector<8x8x128xf32> to vector<1x8x128xf32>
    %331 = vector.shape_cast %330 : vector<1x8x128xf32> to vector<8x128xf32>
    %332 = vector.extract_strided_slice %307 {offsets = [0, 0], sizes = [8, 128], strides = [1, 1]} : vector<8x256xf32> to vector<8x128xf32>
    %333 = arith.addf %331, %332 : vector<8x128xf32>
    %334 = arith.negf %333 : vector<8x128xf32>
    %335 = math.exp %334 : vector<8x128xf32>
    %cst_70 = arith.constant 1.000000e+00 : f32
    %336 = vector.broadcast %cst_70 : f32 to vector<8x128xf32>
    %337 = arith.addf %336, %335 : vector<8x128xf32>
    %338 = arith.divf %336, %337 : vector<8x128xf32>
    %339 = vector.extract_strided_slice %338 {offsets = [0, 0], sizes = [8, 32], strides = [1, 1]} : vector<8x128xf32> to vector<8x32xf32>
    %340 = vector.extract_strided_slice %338 {offsets = [0, 32], sizes = [8, 32], strides = [1, 1]} : vector<8x128xf32> to vector<8x32xf32>
    %341 = vector.extract_strided_slice %338 {offsets = [0, 64], sizes = [8, 32], strides = [1, 1]} : vector<8x128xf32> to vector<8x32xf32>
    %cst_71 = arith.constant 2.000000e+00 : f32
    %342 = vector.broadcast %cst_71 : f32 to vector<8x32xf32>
    %343 = arith.mulf %342, %341 : vector<8x32xf32>
    %cst_72 = arith.constant 1.000000e+00 : f32
    %344 = vector.broadcast %cst_72 : f32 to vector<8x32xf32>
    %345 = arith.subf %343, %344 : vector<8x32xf32>
    %346 = vector.extract_strided_slice %338 {offsets = [0, 96], sizes = [8, 32], strides = [1, 1]} : vector<8x128xf32> to vector<8x32xf32>
    %347 = arith.mulf %340, %304 : vector<8x32xf32>
    %348 = arith.mulf %339, %345 : vector<8x32xf32>
    %349 = arith.addf %347, %348 : vector<8x32xf32>
    %350 = math.tanh %349 : vector<8x32xf32>
    %351 = arith.mulf %346, %350 : vector<8x32xf32>
    %cst_73 = arith.constant dense<0.000000e+00> : vector<8x256xf32>
    %352 = tpu.matmul %351, %8, %cst_73 {dimension_numbers = #tpu.dot_dimension_numbers<[1], [0], [0], [1], [0, 0, 1, 1], [], []>} : vector<8x32xf32>, vector<32x256xf32>, vector<8x256xf32> -> vector<8x256xf32>
    %353 = vector.extract_strided_slice %352 {offsets = [0, 128], sizes = [8, 128], strides = [1, 1]} : vector<8x256xf32> to vector<8x128xf32>
    %354 = arith.addf %353, %329 : vector<8x128xf32>
    %355 = arith.negf %354 : vector<8x128xf32>
    %356 = math.exp %355 : vector<8x128xf32>
    %cst_74 = arith.constant 1.000000e+00 : f32
    %357 = vector.broadcast %cst_74 : f32 to vector<8x128xf32>
    %358 = arith.addf %357, %356 : vector<8x128xf32>
    %359 = arith.divf %357, %358 : vector<8x128xf32>
    %360 = vector.extract_strided_slice %359 {offsets = [0, 0], sizes = [8, 32], strides = [1, 1]} : vector<8x128xf32> to vector<8x32xf32>
    %361 = vector.extract_strided_slice %359 {offsets = [0, 32], sizes = [8, 32], strides = [1, 1]} : vector<8x128xf32> to vector<8x32xf32>
    %362 = vector.extract_strided_slice %359 {offsets = [0, 64], sizes = [8, 32], strides = [1, 1]} : vector<8x128xf32> to vector<8x32xf32>
    %cst_75 = arith.constant 2.000000e+00 : f32
    %363 = vector.broadcast %cst_75 : f32 to vector<8x32xf32>
    %364 = arith.mulf %363, %362 : vector<8x32xf32>
    %cst_76 = arith.constant 1.000000e+00 : f32
    %365 = vector.broadcast %cst_76 : f32 to vector<8x32xf32>
    %366 = arith.subf %364, %365 : vector<8x32xf32>
    %367 = vector.extract_strided_slice %359 {offsets = [0, 96], sizes = [8, 32], strides = [1, 1]} : vector<8x128xf32> to vector<8x32xf32>
    %368 = arith.mulf %361, %325 : vector<8x32xf32>
    %369 = arith.mulf %360, %366 : vector<8x32xf32>
    %370 = arith.addf %368, %369 : vector<8x32xf32>
    %371 = math.tanh %370 : vector<8x32xf32>
    %372 = arith.mulf %367, %371 : vector<8x32xf32>
    %c0_77 = arith.constant 0 : index
    %c0_78 = arith.constant 0 : index
    %373 = vector.load %arg6[%c0_77, %c0_78] : memref<1x32xf32, #tpu.memory_space<vmem>>, vector<1x32xf32>
    %374 = vector.broadcast %373 : vector<1x32xf32> to vector<8x32xf32>
    %375 = arith.mulf %372, %374 : vector<8x32xf32>
    %cst_79 = arith.constant dense<0.000000e+00> : vector<8xf32>
    %376 = vector.multi_reduction <add>, %375, %cst_79 [1] : vector<8x32xf32> to vector<8xf32>
    %377 = vector.shape_cast %376 : vector<8xf32> to vector<8x1xf32>
    %c0_80 = arith.constant 0 : index
    %c0_81 = arith.constant 0 : index
    %378 = vector.load %arg7[%c0_80, %c0_81] : memref<1x1xf32, #tpu.memory_space<vmem>>, vector<1x1xf32>
    %379 = vector.broadcast %378 : vector<1x1xf32> to vector<8x1xf32>
    %380 = arith.addf %377, %379 : vector<8x1xf32>
    %c0_82 = arith.constant 0 : index
    %c0_83 = arith.constant 0 : index
    %381 = vector.load %arg8[%c0_82, %c0_83] : memref<8x1xf32, #tpu.memory_space<vmem>>, vector<8x1xf32>
    tpu.vector_store %arg8[%c0_82, %c0_83], %380 {strides = array<i32>} : memref<8x1xf32, #tpu.memory_space<vmem>>, vector<8x1xf32>,
    return
  }
}

</mosaic_0001>

<llo_original>
// kernel: _lstm_model_forward_impl.1
$region0: #{_lstm_model_forward_impl.1}
  #allocation0 [shape = 'u32[]', space=smem, size = 0x4, offset = 0x4, fixed_abs, tag = 'smem constant byte address 0x4 - core index']
  #allocation1 [shape = 'u32[72,128]{1,0:T(1,128)}', space=vmem, size = 0x9000, scoped, tag = 'internal scratch']
  #allocation2 [shape = 'f32[1,1]{1,0:T(1,128)S(1)}', space=vmem, size = 0x200, scoped, tag = 'scoped memory for _lstm_model_forward_impl.1']
  %s0 = inlined_call_operand.vmem [shape: f32[8,8,16], index: 0, kind: input, shape index: {}]
  %s1 = inlined_call_operand.vmem [shape: f32[16,128], index: 1, kind: input, shape index: {}]
  %s2 = inlined_call_operand.vmem [shape: f32[1,128], index: 2, kind: input, shape index: {}]
  %s3 = inlined_call_operand.vmem [shape: f32[32,256], index: 3, kind: input, shape index: {}]
  %s4 = inlined_call_operand.vmem [shape: f32[32,128], index: 4, kind: input, shape index: {}]
  %s5 = inlined_call_operand.vmem [shape: f32[1,128], index: 5, kind: input, shape index: {}]
  %s6 = inlined_call_operand.vmem [shape: f32[1,32], index: 6, kind: input, shape index: {}]
  %s7 = inlined_call_operand.<no memory space> [shape: f32[1,1], index: 7, kind: input, shape index: {}]
  %s8 = inlined_call_operand.vmem [shape: f32[8,1], index: 8, kind: output, shape index: {}]
  %s9 = sld [smem:[#allocation0]]
  $region42: #{_lstm_model_forward_impl.1} parent=0
    _
  %s11 = ssub.s32 1, %s9
  %s12 = scalar_select 0, %s11, %s9
  %v13 = vstv %s7
  %14 = vst [vmem:[#allocation2] sm:$0x1] %v13
  // Predicated region
  $region2: #{_lstm_model_forward_impl.1} parent=0 // pred_check
    _
  $region3: #{_lstm_model_forward_impl.1} parent=0 // pred_check_branch
    %16 = sbr.rel (0) target = $region5
  $region4: #{_lstm_model_forward_impl.1} parent=0 // pred_region
    _
  $region5: #{_lstm_model_forward_impl.1} parent=0 // pred_fallthru
    _
  // Predicated region
  $region6: #{_lstm_model_forward_impl.1} parent=0 // pred_check
    _
  $region7: #{_lstm_model_forward_impl.1} parent=0 // pred_check_branch
    %18 = sbr.rel (0) target = $region9
  $region8: #{_lstm_model_forward_impl.1} parent=0 // pred_region
    _
  $region9: #{_lstm_model_forward_impl.1} parent=0 // pred_fallthru
    _
  // Predicated region
  $region10: #{_lstm_model_forward_impl.1} parent=0 // pred_check
    _
  $region11: #{_lstm_model_forward_impl.1} parent=0 // pred_check_branch
    %20 = sbr.rel (0) target = $region13
  $region12: #{_lstm_model_forward_impl.1} parent=0 // pred_region
    _
  $region13: #{_lstm_model_forward_impl.1} parent=0 // pred_fallthru
    _
  // Predicated region
  $region14: #{_lstm_model_forward_impl.1} parent=0 // pred_check
    _
  $region15: #{_lstm_model_forward_impl.1} parent=0 // pred_check_branch
    %22 = sbr.rel (0) target = $region17
  $region16: #{_lstm_model_forward_impl.1} parent=0 // pred_region
    _
  $region17: #{_lstm_model_forward_impl.1} parent=0 // pred_fallthru
    _
  // Predicated region
  $region18: #{_lstm_model_forward_impl.1} parent=0 // pred_check
    _
  $region19: #{_lstm_model_forward_impl.1} parent=0 // pred_check_branch
    %24 = sbr.rel (0) target = $region21
  $region20: #{_lstm_model_forward_impl.1} parent=0 // pred_region
    _
  $region21: #{_lstm_model_forward_impl.1} parent=0 // pred_fallthru
    _
  // Predicated region
  $region22: #{_lstm_model_forward_impl.1} parent=0 // pred_check
    _
  $region23: #{_lstm_model_forward_impl.1} parent=0 // pred_check_branch
    %26 = sbr.rel (0) target = $region25
  $region24: #{_lstm_model_forward_impl.1} parent=0 // pred_region
    _
  $region25: #{_lstm_model_forward_impl.1} parent=0 // pred_fallthru
    _
  // Predicated region
  $region26: #{_lstm_model_forward_impl.1} parent=0 // pred_check
    _
  $region27: #{_lstm_model_forward_impl.1} parent=0 // pred_check_branch
    %28 = sbr.rel (0) target = $region29
  $region28: #{_lstm_model_forward_impl.1} parent=0 // pred_region
    _
  $region29: #{_lstm_model_forward_impl.1} parent=0 // pred_fallthru
    _
  // Predicated region
  $region30: #{_lstm_model_forward_impl.1} parent=0 // pred_check
    _
  $region31: #{_lstm_model_forward_impl.1} parent=0 // pred_check_branch
    %30 = sbr.rel (0) target = $region33
  $region32: #{_lstm_model_forward_impl.1} parent=0 // pred_region
    _
  $region33: #{_lstm_model_forward_impl.1} parent=0 // pred_fallthru
    _
  %v31 = vld [vmem:[%s0] sm:$0xff]
  %v32 = vld [vmem:[%s0 + $0x8] sm:$0xff]
  %v33 = vld [vmem:[%s0 + $0x10] sm:$0xff]
  %v34 = vld [vmem:[%s0 + $0x18] sm:$0xff]
  %v35 = vld [vmem:[%s0 + $0x20] sm:$0xff]
  %v36 = vld [vmem:[%s0 + $0x28] sm:$0xff]
  %v37 = vld [vmem:[%s0 + $0x30] sm:$0xff]
  %v38 = vld [vmem:[%s0 + $0x38] sm:$0xff]
  %v39 = vld [vmem:[%s1] sm:$0xff]
  %v40 = vld [vmem:[%s1 + $0x8] sm:$0xff]
  %v41 = vld [vmem:[%s2] sm:$0x1]
  %v43 = vperm.slane %v41, 0
  %vm45 = vcmask 130048
  %v47 = vsel %vm45, %v31, 0
  %v50 = vsel %vm45, %v32, 0
  %v53 = vsel %vm45, %v33, 0
  %v56 = vsel %vm45, %v34, 0
  %v59 = vsel %vm45, %v35, 0
  %v62 = vsel %vm45, %v36, 0
  %v65 = vsel %vm45, %v37, 0
  %v68 = vsel %vm45, %v38, 0
  %70 = vmatpush.msra.mxu0 0.0
  %71 = vmatpush.msra.mxu0 0.0
  %72 = vmatpush.msra.mxu0 0.0
  %73 = vmatpush.msra.mxu0 0.0
  %74 = vmatpush.msra.mxu0 0.0
  %75 = vmatpush.msra.mxu0 0.0
  %76 = vmatpush.msra.mxu0 0.0
  %77 = vmatpush.msra.mxu0 0.0
  %78 = vmatpush.msra.mxu0 0.0
  %79 = vmatpush.msra.mxu0 0.0
  %80 = vmatpush.msra.mxu0 0.0
  %81 = vmatpush.msra.mxu0 0.0
  %82 = vmatpush.msra.mxu0 0.0
  %83 = vmatpush.msra.mxu0 0.0
  %84 = vmatpush.msra.mxu0 %v40
  %85 = vmatpush.msra.mxu0 %v39
  %86 = vmatmul.f32.gmra.mxu0 %v47
  %v87 = vpop.f32.mrf.mxu0
  %v88 = vadd.f32 %v43, %v87
  %89 = vmatmul.f32.gmra.mxu0 %v50
  %v90 = vpop.f32.mrf.mxu0
  %v91 = vadd.f32 %v43, %v90
  %92 = vmatmul.f32.gmra.mxu0 %v53
  %v93 = vpop.f32.mrf.mxu0
  %v94 = vadd.f32 %v43, %v93
  %95 = vmatmul.f32.gmra.mxu0 %v56
  %v96 = vpop.f32.mrf.mxu0
  %v97 = vadd.f32 %v43, %v96
  %98 = vmatmul.f32.gmra.mxu0 %v59
  %v99 = vpop.f32.mrf.mxu0
  %v100 = vadd.f32 %v43, %v99
  %101 = vmatmul.f32.gmra.mxu0 %v62
  %v102 = vpop.f32.mrf.mxu0
  %v103 = vadd.f32 %v43, %v102
  %104 = vmatmul.f32.gmra.mxu0 %v65
  %v105 = vpop.f32.mrf.mxu0
  %v106 = vadd.f32 %v43, %v105
  %107 = vmatmul.f32.gmra.mxu0 %v68
  %v108 = vpop.f32.mrf.mxu0
  %v109 = vadd.f32 %v43, %v108
  %110 = vdwg.mxu0
  %v111 = vld [vmem:[%s3] sm:$0xff]
  %v112 = vld [vmem:[%s3 + $0x8] sm:$0xff]
  %v113 = vld [vmem:[%s3 + $0x10] sm:$0xff]
  %v114 = vld [vmem:[%s3 + $0x18] sm:$0xff]
  %v115 = vld [vmem:[%s3 + $0x20] sm:$0xff]
  %v116 = vld [vmem:[%s3 + $0x28] sm:$0xff]
  %v117 = vld [vmem:[%s3 + $0x30] sm:$0xff]
  %v118 = vld [vmem:[%s3 + $0x38] sm:$0xff]
  %v119 = vld [vmem:[%s4] sm:$0xff]
  %v120 = vld [vmem:[%s4 + $0x8] sm:$0xff]
  %v121 = vld [vmem:[%s4 + $0x10] sm:$0xff]
  %v122 = vld [vmem:[%s4 + $0x18] sm:$0xff]
  %v123 = vld [vmem:[%s5] sm:$0x1]
  %v125 = vperm.slane %v123, 0
  %v127 = vadd.f32 %v88, 0.0
  %v128 = vxor.u32 %v127, 2147483648
  %v129 = vmul.f32 %v128, 1.442695
  %v130 = vpow.pop %v129
  %v131 = vadd.f32 %v130, 1.0
  %v132 = vrcp.pop %v131
  %v133 = vmul.f32 %v131, %v132
  %v134 = vsub.f32 1.0, %v133
  %v135 = vmul.f32 %v132, %v134
  %v136 = vadd.f32 %v132, %v135
  %vm137 = vweird.f32 %v131
  %vm138 = vweird.f32 %v132
  %vm139 = vmor %vm137, %vm138
  %v140 = vsel %vm139, %v132, %v136
  %v141 = vand.u32 2147483647, %v131
  %vm142 = vcmp.eq.f32.partialorder %v141, 8.507059e+37
  %v143 = vand.u32 %v131, 2147483648
  %v144 = vor.u32 1.1754944e-38, %v143
  %v145 = vsel %vm142, %v144, %v140
  %v146 = vmul.f32 1.0, %v145
  %v147 = vmul.f32 %v146, 2.0
  %v148 = vsub.f32 %v147, 1.0
  %v149 = vmul.f32 %v146, 0.0
  %151 = vrot.lane.b32.xlu0 %v148, 64
  %v152 = vpop.permute.xlu0 %151
  %v154 = vmul.f32 %v146, %v152
  %156 = vrot.lane.b32.xlu0 %v154, 32
  %v157 = vpop.permute.xlu0 %156
  %v159 = vadd.f32 %v149, %v157
  %v160 = vtanh.pop %v159
  %162 = vrot.lane.b32.xlu0 %v160, 64
  %v163 = vpop.permute.xlu0 %162
  %v165 = vmul.f32 %v146, %v163
  %167 = vrot.lane.b32.xlu0 %v165, 32
  %v168 = vpop.permute.xlu0 %167
  %vm169 = vcmask 261120
  %v170 = vsel %vm169, %v168, 0
  %172 = vmatpush.msra.mxu0 0.0
  %173 = vmatpush.msra.mxu0 0.0
  %174 = vmatpush.msra.mxu0 0.0
  %175 = vmatpush.msra.mxu0 0.0
  %176 = vmatpush.msra.mxu0 0.0
  %177 = vmatpush.msra.mxu0 0.0
  %178 = vmatpush.msra.mxu0 0.0
  %179 = vmatpush.msra.mxu0 0.0
  %180 = vmatpush.msra.mxu0 0.0
  %181 = vmatpush.msra.mxu0 0.0
  %182 = vmatpush.msra.mxu0 0.0
  %183 = vmatpush.msra.mxu0 0.0
  %184 = vmatpush.msra.mxu0 %v117
  %185 = vmatpush.msra.mxu0 %v115
  %186 = vmatpush.msra.mxu0 %v113
  %187 = vmatpush.msra.mxu0 %v111
  %188 = vmatmul.f32.gmra.mxu0 %v170
  %v189 = vpop.f32.mrf.mxu0
  %v190 = vadd.f32 0.0, %v189
  %191 = vdwg.mxu0
  %192 = vmatpush.msra.mxu0 0.0
  %193 = vmatpush.msra.mxu0 0.0
  %194 = vmatpush.msra.mxu0 0.0
  %195 = vmatpush.msra.mxu0 0.0
  %196 = vmatpush.msra.mxu0 0.0
  %197 = vmatpush.msra.mxu0 0.0
  %198 = vmatpush.msra.mxu0 0.0
  %199 = vmatpush.msra.mxu0 0.0
  %200 = vmatpush.msra.mxu0 0.0
  %201 = vmatpush.msra.mxu0 0.0
  %202 = vmatpush.msra.mxu0 0.0
  %203 = vmatpush.msra.mxu0 0.0
  %204 = vmatpush.msra.mxu0 %v118
  %205 = vmatpush.msra.mxu0 %v116
  %206 = vmatpush.msra.mxu0 %v114
  %207 = vmatpush.msra.mxu0 %v112
  %208 = vmatmul.f32.gmra.mxu0 %v170
  %v209 = vpop.f32.mrf.mxu0
  %v210 = vadd.f32 0.0, %v209
  %211 = vdwg.mxu0
  %v212 = vadd.f32 %v210, %v125
  %v213 = vxor.u32 %v212, 2147483648
  %v214 = vmul.f32 %v213, 1.442695
  %v215 = vpow.pop %v214
  %v216 = vadd.f32 %v215, 1.0
  %v217 = vrcp.pop %v216
  %v218 = vmul.f32 %v216, %v217
  %v219 = vsub.f32 1.0, %v218
  %v220 = vmul.f32 %v217, %v219
  %v221 = vadd.f32 %v217, %v220
  %vm222 = vweird.f32 %v216
  %vm223 = vweird.f32 %v217
  %vm224 = vmor %vm222, %vm223
  %v225 = vsel %vm224, %v217, %v221
  %v226 = vand.u32 2147483647, %v216
  %vm227 = vcmp.eq.f32.partialorder %v226, 8.507059e+37
  %v228 = vand.u32 %v216, 2147483648
  %v229 = vor.u32 1.1754944e-38, %v228
  %v230 = vsel %vm227, %v229, %v225
  %v231 = vmul.f32 1.0, %v230
  %v232 = vmul.f32 %v231, 2.0
  %v233 = vsub.f32 %v232, 1.0
  %v234 = vmul.f32 %v231, 0.0
  %236 = vrot.lane.b32.xlu0 %v233, 64
  %v237 = vpop.permute.xlu0 %236
  %v239 = vmul.f32 %v231, %v237
  %241 = vrot.lane.b32.xlu0 %v239, 32
  %v242 = vpop.permute.xlu0 %241
  %v244 = vadd.f32 %v234, %v242
  %v245 = vtanh.pop %v244
  %247 = vrot.lane.b32.xlu0 %v245, 64
  %v248 = vpop.permute.xlu0 %247
  %v250 = vmul.f32 %v231, %v248
  %252 = vrot.lane.b32.xlu0 %v250, 32
  %v253 = vpop.permute.xlu0 %252
  %v254 = vsel %vm169, %v253, 0
  %256 = vmatpush.msra.mxu0 0.0
  %257 = vmatpush.msra.mxu0 0.0
  %258 = vmatpush.msra.mxu0 0.0
  %259 = vmatpush.msra.mxu0 0.0
  %260 = vmatpush.msra.mxu0 0.0
  %261 = vmatpush.msra.mxu0 0.0
  %262 = vmatpush.msra.mxu0 0.0
  %263 = vmatpush.msra.mxu0 0.0
  %264 = vmatpush.msra.mxu0 0.0
  %265 = vmatpush.msra.mxu0 0.0
  %266 = vmatpush.msra.mxu0 0.0
  %267 = vmatpush.msra.mxu0 0.0
  %268 = vmatpush.msra.mxu0 %v122
  %269 = vmatpush.msra.mxu0 %v121
  %270 = vmatpush.msra.mxu0 %v120
  %271 = vmatpush.msra.mxu0 %v119
  %272 = vmatmul.f32.gmra.mxu0 %v254
  %v273 = vpop.f32.mrf.mxu0
  %v274 = vadd.f32 %v125, %v273
  %275 = vdwg.mxu0
  %v276 = vadd.f32 %v91, %v190
  %v277 = vxor.u32 %v276, 2147483648
  %v278 = vmul.f32 %v277, 1.442695
  %v279 = vpow.pop %v278
  %v280 = vadd.f32 %v279, 1.0
  %v281 = vrcp.pop %v280
  %v282 = vmul.f32 %v280, %v281
  %v283 = vsub.f32 1.0, %v282
  %v284 = vmul.f32 %v281, %v283
  %v285 = vadd.f32 %v281, %v284
  %vm286 = vweird.f32 %v280
  %vm287 = vweird.f32 %v281
  %vm288 = vmor %vm286, %vm287
  %v289 = vsel %vm288, %v281, %v285
  %v290 = vand.u32 2147483647, %v280
  %vm291 = vcmp.eq.f32.partialorder %v290, 8.507059e+37
  %v292 = vand.u32 %v280, 2147483648
  %v293 = vor.u32 1.1754944e-38, %v292
  %v294 = vsel %vm291, %v293, %v289
  %v295 = vmul.f32 1.0, %v294
  %v296 = vmul.f32 %v295, 2.0
  %v297 = vsub.f32 %v296, 1.0
  %v298 = vmul.f32 %v295, %v159
  %300 = vrot.lane.b32.xlu0 %v297, 64
  %v301 = vpop.permute.xlu0 %300
  %v303 = vmul.f32 %v295, %v301
  %305 = vrot.lane.b32.xlu0 %v303, 32
  %v306 = vpop.permute.xlu0 %305
  %v308 = vadd.f32 %v298, %v306
  %v309 = vtanh.pop %v308
  %311 = vrot.lane.b32.xlu0 %v309, 64
  %v312 = vpop.permute.xlu0 %311
  %v314 = vmul.f32 %v295, %v312
  %316 = vrot.lane.b32.xlu0 %v314, 32
  %v317 = vpop.permute.xlu0 %316
  %v318 = vsel %vm169, %v317, 0
  %320 = vmatpush.msra.mxu0 0.0
  %321 = vmatpush.msra.mxu0 0.0
  %322 = vmatpush.msra.mxu0 0.0
  %323 = vmatpush.msra.mxu0 0.0
  %324 = vmatpush.msra.mxu0 0.0
  %325 = vmatpush.msra.mxu0 0.0
  %326 = vmatpush.msra.mxu0 0.0
  %327 = vmatpush.msra.mxu0 0.0
  %328 = vmatpush.msra.mxu0 0.0
  %329 = vmatpush.msra.mxu0 0.0
  %330 = vmatpush.msra.mxu0 0.0
  %331 = vmatpush.msra.mxu0 0.0
  %332 = vmatpush.msra.mxu0 %v117
  %333 = vmatpush.msra.mxu0 %v115
  %334 = vmatpush.msra.mxu0 %v113
  %335 = vmatpush.msra.mxu0 %v111
  %336 = vmatmul.f32.gmra.mxu0 %v318
  %v337 = vpop.f32.mrf.mxu0
  %v338 = vadd.f32 0.0, %v337
  %339 = vdwg.mxu0
  %340 = vmatpush.msra.mxu0 0.0
  %341 = vmatpush.msra.mxu0 0.0
  %342 = vmatpush.msra.mxu0 0.0
  %343 = vmatpush.msra.mxu0 0.0
  %344 = vmatpush.msra.mxu0 0.0
  %345 = vmatpush.msra.mxu0 0.0
  %346 = vmatpush.msra.mxu0 0.0
  %347 = vmatpush.msra.mxu0 0.0
  %348 = vmatpush.msra.mxu0 0.0
  %349 = vmatpush.msra.mxu0 0.0
  %350 = vmatpush.msra.mxu0 0.0
  %351 = vmatpush.msra.mxu0 0.0
  %352 = vmatpush.msra.mxu0 %v118
  %353 = vmatpush.msra.mxu0 %v116
  %354 = vmatpush.msra.mxu0 %v114
  %355 = vmatpush.msra.mxu0 %v112
  %356 = vmatmul.f32.gmra.mxu0 %v318
  %v357 = vpop.f32.mrf.mxu0
  %v358 = vadd.f32 0.0, %v357
  %359 = vdwg.mxu0
  %v360 = vadd.f32 %v358, %v274
  %v361 = vxor.u32 %v360, 2147483648
  %v362 = vmul.f32 %v361, 1.442695
  %v363 = vpow.pop %v362
  %v364 = vadd.f32 %v363, 1.0
  %v365 = vrcp.pop %v364
  %v366 = vmul.f32 %v364, %v365
  %v367 = vsub.f32 1.0, %v366
  %v368 = vmul.f32 %v365, %v367
  %v369 = vadd.f32 %v365, %v368
  %vm370 = vweird.f32 %v364
  %vm371 = vweird.f32 %v365
  %vm372 = vmor %vm370, %vm371
  %v373 = vsel %vm372, %v365, %v369
  %v374 = vand.u32 2147483647, %v364
  %vm375 = vcmp.eq.f32.partialorder %v374, 8.507059e+37
  %v376 = vand.u32 %v364, 2147483648
  %v377 = vor.u32 1.1754944e-38, %v376
  %v378 = vsel %vm375, %v377, %v373
  %v379 = vmul.f32 1.0, %v378
  %v380 = vmul.f32 %v379, 2.0
  %v381 = vsub.f32 %v380, 1.0
  %v382 = vmul.f32 %v379, %v244
  %384 = vrot.lane.b32.xlu0 %v381, 64
  %v385 = vpop.permute.xlu0 %384
  %v387 = vmul.f32 %v379, %v385
  %389 = vrot.lane.b32.xlu0 %v387, 32
  %v390 = vpop.permute.xlu0 %389
  %v392 = vadd.f32 %v382, %v390
  %v393 = vtanh.pop %v392
  %395 = vrot.lane.b32.xlu0 %v393, 64
  %v396 = vpop.permute.xlu0 %395
  %v398 = vmul.f32 %v379, %v396
  %400 = vrot.lane.b32.xlu0 %v398, 32
  %v401 = vpop.permute.xlu0 %400
  %v402 = vsel %vm169, %v401, 0
  %404 = vmatpush.msra.mxu0 0.0
  %405 = vmatpush.msra.mxu0 0.0
  %406 = vmatpush.msra.mxu0 0.0
  %407 = vmatpush.msra.mxu0 0.0
  %408 = vmatpush.msra.mxu0 0.0
  %409 = vmatpush.msra.mxu0 0.0
  %410 = vmatpush.msra.mxu0 0.0
  %411 = vmatpush.msra.mxu0 0.0
  %412 = vmatpush.msra.mxu0 0.0
  %413 = vmatpush.msra.mxu0 0.0
  %414 = vmatpush.msra.mxu0 0.0
  %415 = vmatpush.msra.mxu0 0.0
  %416 = vmatpush.msra.mxu0 %v122
  %417 = vmatpush.msra.mxu0 %v121
  %418 = vmatpush.msra.mxu0 %v120
  %419 = vmatpush.msra.mxu0 %v119
  %420 = vmatmul.f32.gmra.mxu0 %v402
  %v421 = vpop.f32.mrf.mxu0
  %v422 = vadd.f32 %v125, %v421
  %423 = vdwg.mxu0
  %v424 = vadd.f32 %v94, %v338
  %v425 = vxor.u32 %v424, 2147483648
  %v426 = vmul.f32 %v425, 1.442695
  %v427 = vpow.pop %v426
  %v428 = vadd.f32 %v427, 1.0
  %v429 = vrcp.pop %v428
  %v430 = vmul.f32 %v428, %v429
  %v431 = vsub.f32 1.0, %v430
  %v432 = vmul.f32 %v429, %v431
  %v433 = vadd.f32 %v429, %v432
  %vm434 = vweird.f32 %v428
  %vm435 = vweird.f32 %v429
  %vm436 = vmor %vm434, %vm435
  %v437 = vsel %vm436, %v429, %v433
  %v438 = vand.u32 2147483647, %v428
  %vm439 = vcmp.eq.f32.partialorder %v438, 8.507059e+37
  %v440 = vand.u32 %v428, 2147483648
  %v441 = vor.u32 1.1754944e-38, %v440
  %v442 = vsel %vm439, %v441, %v437
  %v443 = vmul.f32 1.0, %v442
  %v444 = vmul.f32 %v443, 2.0
  %v445 = vsub.f32 %v444, 1.0
  %v446 = vmul.f32 %v443, %v308
  %448 = vrot.lane.b32.xlu0 %v445, 64
  %v449 = vpop.permute.xlu0 %448
  %v451 = vmul.f32 %v443, %v449
  %453 = vrot.lane.b32.xlu0 %v451, 32
  %v454 = vpop.permute.xlu0 %453
  %v456 = vadd.f32 %v446, %v454
  %v457 = vtanh.pop %v456
  %459 = vrot.lane.b32.xlu0 %v457, 64
  %v460 = vpop.permute.xlu0 %459
  %v462 = vmul.f32 %v443, %v460
  %464 = vrot.lane.b32.xlu0 %v462, 32
  %v465 = vpop.permute.xlu0 %464
  %v466 = vsel %vm169, %v465, 0
  %468 = vmatpush.msra.mxu0 0.0
  %469 = vmatpush.msra.mxu0 0.0
  %470 = vmatpush.msra.mxu0 0.0
  %471 = vmatpush.msra.mxu0 0.0
  %472 = vmatpush.msra.mxu0 0.0
  %473 = vmatpush.msra.mxu0 0.0
  %474 = vmatpush.msra.mxu0 0.0
  %475 = vmatpush.msra.mxu0 0.0
  %476 = vmatpush.msra.mxu0 0.0
  %477 = vmatpush.msra.mxu0 0.0
  %478 = vmatpush.msra.mxu0 0.0
  %479 = vmatpush.msra.mxu0 0.0
  %480 = vmatpush.msra.mxu0 %v117
  %481 = vmatpush.msra.mxu0 %v115
  %482 = vmatpush.msra.mxu0 %v113
  %483 = vmatpush.msra.mxu0 %v111
  %484 = vmatmul.f32.gmra.mxu0 %v466
  %v485 = vpop.f32.mrf.mxu0
  %v486 = vadd.f32 0.0, %v485
  %487 = vdwg.mxu0
  %488 = vmatpush.msra.mxu0 0.0
  %489 = vmatpush.msra.mxu0 0.0
  %490 = vmatpush.msra.mxu0 0.0
  %491 = vmatpush.msra.mxu0 0.0
  %492 = vmatpush.msra.mxu0 0.0
  %493 = vmatpush.msra.mxu0 0.0
  %494 = vmatpush.msra.mxu0 0.0
  %495 = vmatpush.msra.mxu0 0.0
  %496 = vmatpush.msra.mxu0 0.0
  %497 = vmatpush.msra.mxu0 0.0
  %498 = vmatpush.msra.mxu0 0.0
  %499 = vmatpush.msra.mxu0 0.0
  %500 = vmatpush.msra.mxu0 %v118
  %501 = vmatpush.msra.mxu0 %v116
  %502 = vmatpush.msra.mxu0 %v114
  %503 = vmatpush.msra.mxu0 %v112
  %504 = vmatmul.f32.gmra.mxu0 %v466
  %v505 = vpop.f32.mrf.mxu0
  %v506 = vadd.f32 0.0, %v505
  %507 = vdwg.mxu0
  %v508 = vadd.f32 %v506, %v422
  %v509 = vxor.u32 %v508, 2147483648
  %v510 = vmul.f32 %v509, 1.442695
  %v511 = vpow.pop %v510
  %v512 = vadd.f32 %v511, 1.0
  %v513 = vrcp.pop %v512
  %v514 = vmul.f32 %v512, %v513
  %v515 = vsub.f32 1.0, %v514
  %v516 = vmul.f32 %v513, %v515
  %v517 = vadd.f32 %v513, %v516
  %vm518 = vweird.f32 %v512
  %vm519 = vweird.f32 %v513
  %vm520 = vmor %vm518, %vm519
  %v521 = vsel %vm520, %v513, %v517
  %v522 = vand.u32 2147483647, %v512
  %vm523 = vcmp.eq.f32.partialorder %v522, 8.507059e+37
  %v524 = vand.u32 %v512, 2147483648
  %v525 = vor.u32 1.1754944e-38, %v524
  %v526 = vsel %vm523, %v525, %v521
  %v527 = vmul.f32 1.0, %v526
  %v528 = vmul.f32 %v527, 2.0
  %v529 = vsub.f32 %v528, 1.0
  %v530 = vmul.f32 %v527, %v392
  %532 = vrot.lane.b32.xlu0 %v529, 64
  %v533 = vpop.permute.xlu0 %532
  %v535 = vmul.f32 %v527, %v533
  %537 = vrot.lane.b32.xlu0 %v535, 32
  %v538 = vpop.permute.xlu0 %537
  %v540 = vadd.f32 %v530, %v538
  %v541 = vtanh.pop %v540
  %543 = vrot.lane.b32.xlu0 %v541, 64
  %v544 = vpop.permute.xlu0 %543
  %v546 = vmul.f32 %v527, %v544
  %548 = vrot.lane.b32.xlu0 %v546, 32
  %v549 = vpop.permute.xlu0 %548
  %v550 = vsel %vm169, %v549, 0
  %552 = vmatpush.msra.mxu0 0.0
  %553 = vmatpush.msra.mxu0 0.0
  %554 = vmatpush.msra.mxu0 0.0
  %555 = vmatpush.msra.mxu0 0.0
  %556 = vmatpush.msra.mxu0 0.0
  %557 = vmatpush.msra.mxu0 0.0
  %558 = vmatpush.msra.mxu0 0.0
  %559 = vmatpush.msra.mxu0 0.0
  %560 = vmatpush.msra.mxu0 0.0
  %561 = vmatpush.msra.mxu0 0.0
  %562 = vmatpush.msra.mxu0 0.0
  %563 = vmatpush.msra.mxu0 0.0
  %564 = vmatpush.msra.mxu0 %v122
  %565 = vmatpush.msra.mxu0 %v121
  %566 = vmatpush.msra.mxu0 %v120
  %567 = vmatpush.msra.mxu0 %v119
  %568 = vmatmul.f32.gmra.mxu0 %v550
  %v569 = vpop.f32.mrf.mxu0
  %v570 = vadd.f32 %v125, %v569
  %571 = vdwg.mxu0
  %v572 = vadd.f32 %v97, %v486
  %v573 = vxor.u32 %v572, 2147483648
  %v574 = vmul.f32 %v573, 1.442695
  %v575 = vpow.pop %v574
  %v576 = vadd.f32 %v575, 1.0
  %v577 = vrcp.pop %v576
  %v578 = vmul.f32 %v576, %v577
  %v579 = vsub.f32 1.0, %v578
  %v580 = vmul.f32 %v577, %v579
  %v581 = vadd.f32 %v577, %v580
  %vm582 = vweird.f32 %v576
  %vm583 = vweird.f32 %v577
  %vm584 = vmor %vm582, %vm583
  %v585 = vsel %vm584, %v577, %v581
  %v586 = vand.u32 2147483647, %v576
  %vm587 = vcmp.eq.f32.partialorder %v586, 8.507059e+37
  %v588 = vand.u32 %v576, 2147483648
  %v589 = vor.u32 1.1754944e-38, %v588
  %v590 = vsel %vm587, %v589, %v585
  %v591 = vmul.f32 1.0, %v590
  %v592 = vmul.f32 %v591, 2.0
  %v593 = vsub.f32 %v592, 1.0
  %v594 = vmul.f32 %v591, %v456
  %596 = vrot.lane.b32.xlu0 %v593, 64
  %v597 = vpop.permute.xlu0 %596
  %v599 = vmul.f32 %v591, %v597
  %601 = vrot.lane.b32.xlu0 %v599, 32
  %v602 = vpop.permute.xlu0 %601
  %v604 = vadd.f32 %v594, %v602
  %v605 = vtanh.pop %v604
  %607 = vrot.lane.b32.xlu0 %v605, 64
  %v608 = vpop.permute.xlu0 %607
  %v610 = vmul.f32 %v591, %v608
  %612 = vrot.lane.b32.xlu0 %v610, 32
  %v613 = vpop.permute.xlu0 %612
  %v614 = vsel %vm169, %v613, 0
  %616 = vmatpush.msra.mxu0 0.0
  %617 = vmatpush.msra.mxu0 0.0
  %618 = vmatpush.msra.mxu0 0.0
  %619 = vmatpush.msra.mxu0 0.0
  %620 = vmatpush.msra.mxu0 0.0
  %621 = vmatpush.msra.mxu0 0.0
  %622 = vmatpush.msra.mxu0 0.0
  %623 = vmatpush.msra.mxu0 0.0
  %624 = vmatpush.msra.mxu0 0.0
  %625 = vmatpush.msra.mxu0 0.0
  %626 = vmatpush.msra.mxu0 0.0
  %627 = vmatpush.msra.mxu0 0.0
  %628 = vmatpush.msra.mxu0 %v117
  %629 = vmatpush.msra.mxu0 %v115
  %630 = vmatpush.msra.mxu0 %v113
  %631 = vmatpush.msra.mxu0 %v111
  %632 = vmatmul.f32.gmra.mxu0 %v614
  %v633 = vpop.f32.mrf.mxu0
  %v634 = vadd.f32 0.0, %v633
  %635 = vdwg.mxu0
  %636 = vmatpush.msra.mxu0 0.0
  %637 = vmatpush.msra.mxu0 0.0
  %638 = vmatpush.msra.mxu0 0.0
  %639 = vmatpush.msra.mxu0 0.0
  %640 = vmatpush.msra.mxu0 0.0
  %641 = vmatpush.msra.mxu0 0.0
  %642 = vmatpush.msra.mxu0 0.0
  %643 = vmatpush.msra.mxu0 0.0
  %644 = vmatpush.msra.mxu0 0.0
  %645 = vmatpush.msra.mxu0 0.0
  %646 = vmatpush.msra.mxu0 0.0
  %647 = vmatpush.msra.mxu0 0.0
  %648 = vmatpush.msra.mxu0 %v118
  %649 = vmatpush.msra.mxu0 %v116
  %650 = vmatpush.msra.mxu0 %v114
  %651 = vmatpush.msra.mxu0 %v112
  %652 = vmatmul.f32.gmra.mxu0 %v614
  %v653 = vpop.f32.mrf.mxu0
  %v654 = vadd.f32 0.0, %v653
  %655 = vdwg.mxu0
  %v656 = vadd.f32 %v654, %v570
  %v657 = vxor.u32 %v656, 2147483648
  %v658 = vmul.f32 %v657, 1.442695
  %v659 = vpow.pop %v658
  %v660 = vadd.f32 %v659, 1.0
  %v661 = vrcp.pop %v660
  %v662 = vmul.f32 %v660, %v661
  %v663 = vsub.f32 1.0, %v662
  %v664 = vmul.f32 %v661, %v663
  %v665 = vadd.f32 %v661, %v664
  %vm666 = vweird.f32 %v660
  %vm667 = vweird.f32 %v661
  %vm668 = vmor %vm666, %vm667
  %v669 = vsel %vm668, %v661, %v665
  %v670 = vand.u32 2147483647, %v660
  %vm671 = vcmp.eq.f32.partialorder %v670, 8.507059e+37
  %v672 = vand.u32 %v660, 2147483648
  %v673 = vor.u32 1.1754944e-38, %v672
  %v674 = vsel %vm671, %v673, %v669
  %v675 = vmul.f32 1.0, %v674
  %v676 = vmul.f32 %v675, 2.0
  %v677 = vsub.f32 %v676, 1.0
  %v678 = vmul.f32 %v675, %v540
  %680 = vrot.lane.b32.xlu0 %v677, 64
  %v681 = vpop.permute.xlu0 %680
  %v683 = vmul.f32 %v675, %v681
  %685 = vrot.lane.b32.xlu0 %v683, 32
  %v686 = vpop.permute.xlu0 %685
  %v688 = vadd.f32 %v678, %v686
  %v689 = vtanh.pop %v688
  %691 = vrot.lane.b32.xlu0 %v689, 64
  %v692 = vpop.permute.xlu0 %691
  %v694 = vmul.f32 %v675, %v692
  %696 = vrot.lane.b32.xlu0 %v694, 32
  %v697 = vpop.permute.xlu0 %696
  %v698 = vsel %vm169, %v697, 0
  %700 = vmatpush.msra.mxu0 0.0
  %701 = vmatpush.msra.mxu0 0.0
  %702 = vmatpush.msra.mxu0 0.0
  %703 = vmatpush.msra.mxu0 0.0
  %704 = vmatpush.msra.mxu0 0.0
  %705 = vmatpush.msra.mxu0 0.0
  %706 = vmatpush.msra.mxu0 0.0
  %707 = vmatpush.msra.mxu0 0.0
  %708 = vmatpush.msra.mxu0 0.0
  %709 = vmatpush.msra.mxu0 0.0
  %710 = vmatpush.msra.mxu0 0.0
  %711 = vmatpush.msra.mxu0 0.0
  %712 = vmatpush.msra.mxu0 %v122
  %713 = vmatpush.msra.mxu0 %v121
  %714 = vmatpush.msra.mxu0 %v120
  %715 = vmatpush.msra.mxu0 %v119
  %716 = vmatmul.f32.gmra.mxu0 %v698
  %v717 = vpop.f32.mrf.mxu0
  %v718 = vadd.f32 %v125, %v717
  %719 = vdwg.mxu0
  %v720 = vadd.f32 %v100, %v634
  %v721 = vxor.u32 %v720, 2147483648
  %v722 = vmul.f32 %v721, 1.442695
  %v723 = vpow.pop %v722
  %v724 = vadd.f32 %v723, 1.0
  %v725 = vrcp.pop %v724
  %v726 = vmul.f32 %v724, %v725
  %v727 = vsub.f32 1.0, %v726
  %v728 = vmul.f32 %v725, %v727
  %v729 = vadd.f32 %v725, %v728
  %vm730 = vweird.f32 %v724
  %vm731 = vweird.f32 %v725
  %vm732 = vmor %vm730, %vm731
  %v733 = vsel %vm732, %v725, %v729
  %v734 = vand.u32 2147483647, %v724
  %vm735 = vcmp.eq.f32.partialorder %v734, 8.507059e+37
  %v736 = vand.u32 %v724, 2147483648
  %v737 = vor.u32 1.1754944e-38, %v736
  %v738 = vsel %vm735, %v737, %v733
  %v739 = vmul.f32 1.0, %v738
  %v740 = vmul.f32 %v739, 2.0
  %v741 = vsub.f32 %v740, 1.0
  %v742 = vmul.f32 %v739, %v604
  %744 = vrot.lane.b32.xlu0 %v741, 64
  %v745 = vpop.permute.xlu0 %744
  %v747 = vmul.f32 %v739, %v745
  %749 = vrot.lane.b32.xlu0 %v747, 32
  %v750 = vpop.permute.xlu0 %749
  %v752 = vadd.f32 %v742, %v750
  %v753 = vtanh.pop %v752
  %755 = vrot.lane.b32.xlu0 %v753, 64
  %v756 = vpop.permute.xlu0 %755
  %v758 = vmul.f32 %v739, %v756
  %760 = vrot.lane.b32.xlu0 %v758, 32
  %v761 = vpop.permute.xlu0 %760
  %v762 = vsel %vm169, %v761, 0
  %764 = vmatpush.msra.mxu0 0.0
  %765 = vmatpush.msra.mxu0 0.0
  %766 = vmatpush.msra.mxu0 0.0
  %767 = vmatpush.msra.mxu0 0.0
  %768 = vmatpush.msra.mxu0 0.0
  %769 = vmatpush.msra.mxu0 0.0
  %770 = vmatpush.msra.mxu0 0.0
  %771 = vmatpush.msra.mxu0 0.0
  %772 = vmatpush.msra.mxu0 0.0
  %773 = vmatpush.msra.mxu0 0.0
  %774 = vmatpush.msra.mxu0 0.0
  %775 = vmatpush.msra.mxu0 0.0
  %776 = vmatpush.msra.mxu0 %v117
  %777 = vmatpush.msra.mxu0 %v115
  %778 = vmatpush.msra.mxu0 %v113
  %779 = vmatpush.msra.mxu0 %v111
  %780 = vmatmul.f32.gmra.mxu0 %v762
  %v781 = vpop.f32.mrf.mxu0
  %v782 = vadd.f32 0.0, %v781
  %783 = vdwg.mxu0
  %784 = vmatpush.msra.mxu0 0.0
  %785 = vmatpush.msra.mxu0 0.0
  %786 = vmatpush.msra.mxu0 0.0
  %787 = vmatpush.msra.mxu0 0.0
  %788 = vmatpush.msra.mxu0 0.0
  %789 = vmatpush.msra.mxu0 0.0
  %790 = vmatpush.msra.mxu0 0.0
  %791 = vmatpush.msra.mxu0 0.0
  %792 = vmatpush.msra.mxu0 0.0
  %793 = vmatpush.msra.mxu0 0.0
  %794 = vmatpush.msra.mxu0 0.0
  %795 = vmatpush.msra.mxu0 0.0
  %796 = vmatpush.msra.mxu0 %v118
  %797 = vmatpush.msra.mxu0 %v116
  %798 = vmatpush.msra.mxu0 %v114
  %799 = vmatpush.msra.mxu0 %v112
  %800 = vmatmul.f32.gmra.mxu0 %v762
  %v801 = vpop.f32.mrf.mxu0
  %v802 = vadd.f32 0.0, %v801
  %803 = vdwg.mxu0
  %v804 = vadd.f32 %v802, %v718
  %v805 = vxor.u32 %v804, 2147483648
  %v806 = vmul.f32 %v805, 1.442695
  %v807 = vpow.pop %v806
  %v808 = vadd.f32 %v807, 1.0
  %v809 = vrcp.pop %v808
  %v810 = vmul.f32 %v808, %v809
  %v811 = vsub.f32 1.0, %v810
  %v812 = vmul.f32 %v809, %v811
  %v813 = vadd.f32 %v809, %v812
  %vm814 = vweird.f32 %v808
  %vm815 = vweird.f32 %v809
  %vm816 = vmor %vm814, %vm815
  %v817 = vsel %vm816, %v809, %v813
  %v818 = vand.u32 2147483647, %v808
  %vm819 = vcmp.eq.f32.partialorder %v818, 8.507059e+37
  %v820 = vand.u32 %v808, 2147483648
  %v821 = vor.u32 1.1754944e-38, %v820
  %v822 = vsel %vm819, %v821, %v817
  %v823 = vmul.f32 1.0, %v822
  %v824 = vmul.f32 %v823, 2.0
  %v825 = vsub.f32 %v824, 1.0
  %v826 = vmul.f32 %v823, %v688
  %828 = vrot.lane.b32.xlu0 %v825, 64
  %v829 = vpop.permute.xlu0 %828
  %v831 = vmul.f32 %v823, %v829
  %833 = vrot.lane.b32.xlu0 %v831, 32
  %v834 = vpop.permute.xlu0 %833
  %v836 = vadd.f32 %v826, %v834
  %v837 = vtanh.pop %v836
  %839 = vrot.lane.b32.xlu0 %v837, 64
  %v840 = vpop.permute.xlu0 %839
  %v842 = vmul.f32 %v823, %v840
  %844 = vrot.lane.b32.xlu0 %v842, 32
  %v845 = vpop.permute.xlu0 %844
  %v846 = vsel %vm169, %v845, 0
  %848 = vmatpush.msra.mxu0 0.0
  %849 = vmatpush.msra.mxu0 0.0
  %850 = vmatpush.msra.mxu0 0.0
  %851 = vmatpush.msra.mxu0 0.0
  %852 = vmatpush.msra.mxu0 0.0
  %853 = vmatpush.msra.mxu0 0.0
  %854 = vmatpush.msra.mxu0 0.0
  %855 = vmatpush.msra.mxu0 0.0
  %856 = vmatpush.msra.mxu0 0.0
  %857 = vmatpush.msra.mxu0 0.0
  %858 = vmatpush.msra.mxu0 0.0
  %859 = vmatpush.msra.mxu0 0.0
  %860 = vmatpush.msra.mxu0 %v122
  %861 = vmatpush.msra.mxu0 %v121
  %862 = vmatpush.msra.mxu0 %v120
  %863 = vmatpush.msra.mxu0 %v119
  %864 = vmatmul.f32.gmra.mxu0 %v846
  %v865 = vpop.f32.mrf.mxu0
  %v866 = vadd.f32 %v125, %v865
  %867 = vdwg.mxu0
  %v868 = vadd.f32 %v103, %v782
  %v869 = vxor.u32 %v868, 2147483648
  %v870 = vmul.f32 %v869, 1.442695
  %v871 = vpow.pop %v870
  %v872 = vadd.f32 %v871, 1.0
  %v873 = vrcp.pop %v872
  %v874 = vmul.f32 %v872, %v873
  %v875 = vsub.f32 1.0, %v874
  %v876 = vmul.f32 %v873, %v875
  %v877 = vadd.f32 %v873, %v876
  %vm878 = vweird.f32 %v872
  %vm879 = vweird.f32 %v873
  %vm880 = vmor %vm878, %vm879
  %v881 = vsel %vm880, %v873, %v877
  %v882 = vand.u32 2147483647, %v872
  %vm883 = vcmp.eq.f32.partialorder %v882, 8.507059e+37
  %v884 = vand.u32 %v872, 2147483648
  %v885 = vor.u32 1.1754944e-38, %v884
  %v886 = vsel %vm883, %v885, %v881
  %v887 = vmul.f32 1.0, %v886
  %v888 = vmul.f32 %v887, 2.0
  %v889 = vsub.f32 %v888, 1.0
  %v890 = vmul.f32 %v887, %v752
  %892 = vrot.lane.b32.xlu0 %v889, 64
  %v893 = vpop.permute.xlu0 %892
  %v895 = vmul.f32 %v887, %v893
  %897 = vrot.lane.b32.xlu0 %v895, 32
  %v898 = vpop.permute.xlu0 %897
  %v900 = vadd.f32 %v890, %v898
  %v901 = vtanh.pop %v900
  %903 = vrot.lane.b32.xlu0 %v901, 64
  %v904 = vpop.permute.xlu0 %903
  %v906 = vmul.f32 %v887, %v904
  %908 = vrot.lane.b32.xlu0 %v906, 32
  %v909 = vpop.permute.xlu0 %908
  %v910 = vsel %vm169, %v909, 0
  %912 = vmatpush.msra.mxu0 0.0
  %913 = vmatpush.msra.mxu0 0.0
  %914 = vmatpush.msra.mxu0 0.0
  %915 = vmatpush.msra.mxu0 0.0
  %916 = vmatpush.msra.mxu0 0.0
  %917 = vmatpush.msra.mxu0 0.0
  %918 = vmatpush.msra.mxu0 0.0
  %919 = vmatpush.msra.mxu0 0.0
  %920 = vmatpush.msra.mxu0 0.0
  %921 = vmatpush.msra.mxu0 0.0
  %922 = vmatpush.msra.mxu0 0.0
  %923 = vmatpush.msra.mxu0 0.0
  %924 = vmatpush.msra.mxu0 %v117
  %925 = vmatpush.msra.mxu0 %v115
  %926 = vmatpush.msra.mxu0 %v113
  %927 = vmatpush.msra.mxu0 %v111
  %928 = vmatmul.f32.gmra.mxu0 %v910
  %v929 = vpop.f32.mrf.mxu0
  %v930 = vadd.f32 0.0, %v929
  %931 = vdwg.mxu0
  %932 = vmatpush.msra.mxu0 0.0
  %933 = vmatpush.msra.mxu0 0.0
  %934 = vmatpush.msra.mxu0 0.0
  %935 = vmatpush.msra.mxu0 0.0
  %936 = vmatpush.msra.mxu0 0.0
  %937 = vmatpush.msra.mxu0 0.0
  %938 = vmatpush.msra.mxu0 0.0
  %939 = vmatpush.msra.mxu0 0.0
  %940 = vmatpush.msra.mxu0 0.0
  %941 = vmatpush.msra.mxu0 0.0
  %942 = vmatpush.msra.mxu0 0.0
  %943 = vmatpush.msra.mxu0 0.0
  %944 = vmatpush.msra.mxu0 %v118
  %945 = vmatpush.msra.mxu0 %v116
  %946 = vmatpush.msra.mxu0 %v114
  %947 = vmatpush.msra.mxu0 %v112
  %948 = vmatmul.f32.gmra.mxu0 %v910
  %v949 = vpop.f32.mrf.mxu0
  %v950 = vadd.f32 0.0, %v949
  %951 = vdwg.mxu0
  %v952 = vadd.f32 %v950, %v866
  %v953 = vxor.u32 %v952, 2147483648
  %v954 = vmul.f32 %v953, 1.442695
  %v955 = vpow.pop %v954
  %v956 = vadd.f32 %v955, 1.0
  %v957 = vrcp.pop %v956
  %v958 = vmul.f32 %v956, %v957
  %v959 = vsub.f32 1.0, %v958
  %v960 = vmul.f32 %v957, %v959
  %v961 = vadd.f32 %v957, %v960
  %vm962 = vweird.f32 %v956
  %vm963 = vweird.f32 %v957
  %vm964 = vmor %vm962, %vm963
  %v965 = vsel %vm964, %v957, %v961
  %v966 = vand.u32 2147483647, %v956
  %vm967 = vcmp.eq.f32.partialorder %v966, 8.507059e+37
  %v968 = vand.u32 %v956, 2147483648
  %v969 = vor.u32 1.1754944e-38, %v968
  %v970 = vsel %vm967, %v969, %v965
  %v971 = vmul.f32 1.0, %v970
  %v972 = vmul.f32 %v971, 2.0
  %v973 = vsub.f32 %v972, 1.0
  %v974 = vmul.f32 %v971, %v836
  %976 = vrot.lane.b32.xlu0 %v973, 64
  %v977 = vpop.permute.xlu0 %976
  %v979 = vmul.f32 %v971, %v977
  %981 = vrot.lane.b32.xlu0 %v979, 32
  %v982 = vpop.permute.xlu0 %981
  %v984 = vadd.f32 %v974, %v982
  %v985 = vtanh.pop %v984
  %987 = vrot.lane.b32.xlu0 %v985, 64
  %v988 = vpop.permute.xlu0 %987
  %v990 = vmul.f32 %v971, %v988
  %992 = vrot.lane.b32.xlu0 %v990, 32
  %v993 = vpop.permute.xlu0 %992
  %v994 = vsel %vm169, %v993, 0
  %996 = vmatpush.msra.mxu0 0.0
  %997 = vmatpush.msra.mxu0 0.0
  %998 = vmatpush.msra.mxu0 0.0
  %999 = vmatpush.msra.mxu0 0.0
  %1000 = vmatpush.msra.mxu0 0.0
  %1001 = vmatpush.msra.mxu0 0.0
  %1002 = vmatpush.msra.mxu0 0.0
  %1003 = vmatpush.msra.mxu0 0.0
  %1004 = vmatpush.msra.mxu0 0.0
  %1005 = vmatpush.msra.mxu0 0.0
  %1006 = vmatpush.msra.mxu0 0.0
  %1007 = vmatpush.msra.mxu0 0.0
  %1008 = vmatpush.msra.mxu0 %v122
  %1009 = vmatpush.msra.mxu0 %v121
  %1010 = vmatpush.msra.mxu0 %v120
  %1011 = vmatpush.msra.mxu0 %v119
  %1012 = vmatmul.f32.gmra.mxu0 %v994
  %v1013 = vpop.f32.mrf.mxu0
  %v1014 = vadd.f32 %v125, %v1013
  %1015 = vdwg.mxu0
  %v1016 = vadd.f32 %v106, %v930
  %v1017 = vxor.u32 %v1016, 2147483648
  %v1018 = vmul.f32 %v1017, 1.442695
  %v1019 = vpow.pop %v1018
  %v1020 = vadd.f32 %v1019, 1.0
  %v1021 = vrcp.pop %v1020
  %v1022 = vmul.f32 %v1020, %v1021
  %v1023 = vsub.f32 1.0, %v1022
  %v1024 = vmul.f32 %v1021, %v1023
  %v1025 = vadd.f32 %v1021, %v1024
  %vm1026 = vweird.f32 %v1020
  %vm1027 = vweird.f32 %v1021
  %vm1028 = vmor %vm1026, %vm1027
  %v1029 = vsel %vm1028, %v1021, %v1025
  %v1030 = vand.u32 2147483647, %v1020
  %vm1031 = vcmp.eq.f32.partialorder %v1030, 8.507059e+37
  %v1032 = vand.u32 %v1020, 2147483648
  %v1033 = vor.u32 1.1754944e-38, %v1032
  %v1034 = vsel %vm1031, %v1033, %v1029
  %v1035 = vmul.f32 1.0, %v1034
  %v1036 = vmul.f32 %v1035, 2.0
  %v1037 = vsub.f32 %v1036, 1.0
  %v1038 = vmul.f32 %v1035, %v900
  %1040 = vrot.lane.b32.xlu0 %v1037, 64
  %v1041 = vpop.permute.xlu0 %1040
  %v1043 = vmul.f32 %v1035, %v1041
  %1045 = vrot.lane.b32.xlu0 %v1043, 32
  %v1046 = vpop.permute.xlu0 %1045
  %v1048 = vadd.f32 %v1038, %v1046
  %v1049 = vtanh.pop %v1048
  %1051 = vrot.lane.b32.xlu0 %v1049, 64
  %v1052 = vpop.permute.xlu0 %1051
  %v1054 = vmul.f32 %v1035, %v1052
  %1056 = vrot.lane.b32.xlu0 %v1054, 32
  %v1057 = vpop.permute.xlu0 %1056
  %v1058 = vsel %vm169, %v1057, 0
  %1060 = vmatpush.msra.mxu0 0.0
  %1061 = vmatpush.msra.mxu0 0.0
  %1062 = vmatpush.msra.mxu0 0.0
  %1063 = vmatpush.msra.mxu0 0.0
  %1064 = vmatpush.msra.mxu0 0.0
  %1065 = vmatpush.msra.mxu0 0.0
  %1066 = vmatpush.msra.mxu0 0.0
  %1067 = vmatpush.msra.mxu0 0.0
  %1068 = vmatpush.msra.mxu0 0.0
  %1069 = vmatpush.msra.mxu0 0.0
  %1070 = vmatpush.msra.mxu0 0.0
  %1071 = vmatpush.msra.mxu0 0.0
  %1072 = vmatpush.msra.mxu0 %v117
  %1073 = vmatpush.msra.mxu0 %v115
  %1074 = vmatpush.msra.mxu0 %v113
  %1075 = vmatpush.msra.mxu0 %v111
  %1076 = vmatmul.f32.gmra.mxu0 %v1058
  %v1077 = vpop.f32.mrf.mxu0
  %v1078 = vadd.f32 0.0, %v1077
  %1079 = vdwg.mxu0
  %1080 = vmatpush.msra.mxu0 0.0
  %1081 = vmatpush.msra.mxu0 0.0
  %1082 = vmatpush.msra.mxu0 0.0
  %1083 = vmatpush.msra.mxu0 0.0
  %1084 = vmatpush.msra.mxu0 0.0
  %1085 = vmatpush.msra.mxu0 0.0
  %1086 = vmatpush.msra.mxu0 0.0
  %1087 = vmatpush.msra.mxu0 0.0
  %1088 = vmatpush.msra.mxu0 0.0
  %1089 = vmatpush.msra.mxu0 0.0
  %1090 = vmatpush.msra.mxu0 0.0
  %1091 = vmatpush.msra.mxu0 0.0
  %1092 = vmatpush.msra.mxu0 %v118
  %1093 = vmatpush.msra.mxu0 %v116
  %1094 = vmatpush.msra.mxu0 %v114
  %1095 = vmatpush.msra.mxu0 %v112
  %1096 = vmatmul.f32.gmra.mxu0 %v1058
  %v1097 = vpop.f32.mrf.mxu0
  %v1098 = vadd.f32 0.0, %v1097
  %1099 = vdwg.mxu0
  %v1100 = vadd.f32 %v1098, %v1014
  %v1101 = vxor.u32 %v1100, 2147483648
  %v1102 = vmul.f32 %v1101, 1.442695
  %v1103 = vpow.pop %v1102
  %v1104 = vadd.f32 %v1103, 1.0
  %v1105 = vrcp.pop %v1104
  %v1106 = vmul.f32 %v1104, %v1105
  %v1107 = vsub.f32 1.0, %v1106
  %v1108 = vmul.f32 %v1105, %v1107
  %v1109 = vadd.f32 %v1105, %v1108
  %vm1110 = vweird.f32 %v1104
  %vm1111 = vweird.f32 %v1105
  %vm1112 = vmor %vm1110, %vm1111
  %v1113 = vsel %vm1112, %v1105, %v1109
  %v1114 = vand.u32 2147483647, %v1104
  %vm1115 = vcmp.eq.f32.partialorder %v1114, 8.507059e+37
  %v1116 = vand.u32 %v1104, 2147483648
  %v1117 = vor.u32 1.1754944e-38, %v1116
  %v1118 = vsel %vm1115, %v1117, %v1113
  %v1119 = vmul.f32 1.0, %v1118
  %v1120 = vmul.f32 %v1119, 2.0
  %v1121 = vsub.f32 %v1120, 1.0
  %v1122 = vmul.f32 %v1119, %v984
  %1124 = vrot.lane.b32.xlu0 %v1121, 64
  %v1125 = vpop.permute.xlu0 %1124
  %v1127 = vmul.f32 %v1119, %v1125
  %1129 = vrot.lane.b32.xlu0 %v1127, 32
  %v1130 = vpop.permute.xlu0 %1129
  %v1132 = vadd.f32 %v1122, %v1130
  %v1133 = vtanh.pop %v1132
  %1135 = vrot.lane.b32.xlu0 %v1133, 64
  %v1136 = vpop.permute.xlu0 %1135
  %v1138 = vmul.f32 %v1119, %v1136
  %1140 = vrot.lane.b32.xlu0 %v1138, 32
  %v1141 = vpop.permute.xlu0 %1140
  %v1142 = vsel %vm169, %v1141, 0
  %1144 = vmatpush.msra.mxu0 0.0
  %1145 = vmatpush.msra.mxu0 0.0
  %1146 = vmatpush.msra.mxu0 0.0
  %1147 = vmatpush.msra.mxu0 0.0
  %1148 = vmatpush.msra.mxu0 0.0
  %1149 = vmatpush.msra.mxu0 0.0
  %1150 = vmatpush.msra.mxu0 0.0
  %1151 = vmatpush.msra.mxu0 0.0
  %1152 = vmatpush.msra.mxu0 0.0
  %1153 = vmatpush.msra.mxu0 0.0
  %1154 = vmatpush.msra.mxu0 0.0
  %1155 = vmatpush.msra.mxu0 0.0
  %1156 = vmatpush.msra.mxu0 %v122
  %1157 = vmatpush.msra.mxu0 %v121
  %1158 = vmatpush.msra.mxu0 %v120
  %1159 = vmatpush.msra.mxu0 %v119
  %1160 = vmatmul.f32.gmra.mxu0 %v1142
  %v1161 = vpop.f32.mrf.mxu0
  %v1162 = vadd.f32 %v125, %v1161
  %1163 = vdwg.mxu0
  %v1164 = vadd.f32 %v109, %v1078
  %v1165 = vxor.u32 %v1164, 2147483648
  %v1166 = vmul.f32 %v1165, 1.442695
  %v1167 = vpow.pop %v1166
  %v1168 = vadd.f32 %v1167, 1.0
  %v1169 = vrcp.pop %v1168
  %v1170 = vmul.f32 %v1168, %v1169
  %v1171 = vsub.f32 1.0, %v1170
  %v1172 = vmul.f32 %v1169, %v1171
  %v1173 = vadd.f32 %v1169, %v1172
  %vm1174 = vweird.f32 %v1168
  %vm1175 = vweird.f32 %v1169
  %vm1176 = vmor %vm1174, %vm1175
  %v1177 = vsel %vm1176, %v1169, %v1173
  %v1178 = vand.u32 2147483647, %v1168
  %vm1179 = vcmp.eq.f32.partialorder %v1178, 8.507059e+37
  %v1180 = vand.u32 %v1168, 2147483648
  %v1181 = vor.u32 1.1754944e-38, %v1180
  %v1182 = vsel %vm1179, %v1181, %v1177
  %v1183 = vmul.f32 1.0, %v1182
  %v1184 = vmul.f32 %v1183, 2.0
  %v1185 = vsub.f32 %v1184, 1.0
  %v1186 = vmul.f32 %v1183, %v1048
  %1188 = vrot.lane.b32.xlu0 %v1185, 64
  %v1189 = vpop.permute.xlu0 %1188
  %v1191 = vmul.f32 %v1183, %v1189
  %1193 = vrot.lane.b32.xlu0 %v1191, 32
  %v1194 = vpop.permute.xlu0 %1193
  %v1196 = vadd.f32 %v1186, %v1194
  %v1197 = vtanh.pop %v1196
  %1199 = vrot.lane.b32.xlu0 %v1197, 64
  %v1200 = vpop.permute.xlu0 %1199
  %v1202 = vmul.f32 %v1183, %v1200
  %1204 = vrot.lane.b32.xlu0 %v1202, 32
  %v1205 = vpop.permute.xlu0 %1204
  %v1206 = vsel %vm169, %v1205, 0
  %1208 = vmatpush.msra.mxu0 0.0
  %1209 = vmatpush.msra.mxu0 0.0
  %1210 = vmatpush.msra.mxu0 0.0
  %1211 = vmatpush.msra.mxu0 0.0
  %1212 = vmatpush.msra.mxu0 0.0
  %1213 = vmatpush.msra.mxu0 0.0
  %1214 = vmatpush.msra.mxu0 0.0
  %1215 = vmatpush.msra.mxu0 0.0
  %1216 = vmatpush.msra.mxu0 0.0
  %1217 = vmatpush.msra.mxu0 0.0
  %1218 = vmatpush.msra.mxu0 0.0
  %1219 = vmatpush.msra.mxu0 0.0
  %1220 = vmatpush.msra.mxu0 %v118
  %1221 = vmatpush.msra.mxu0 %v116
  %1222 = vmatpush.msra.mxu0 %v114
  %1223 = vmatpush.msra.mxu0 %v112
  %1224 = vmatmul.f32.gmra.mxu0 %v1206
  %v1225 = vpop.f32.mrf.mxu0
  %v1226 = vadd.f32 0.0, %v1225
  %1227 = vdwg.mxu0
  %v1228 = vadd.f32 %v1226, %v1162
  %v1229 = vxor.u32 %v1228, 2147483648
  %v1230 = vmul.f32 %v1229, 1.442695
  %v1231 = vpow.pop %v1230
  %v1232 = vadd.f32 %v1231, 1.0
  %v1233 = vrcp.pop %v1232
  %v1234 = vmul.f32 %v1232, %v1233
  %v1235 = vsub.f32 1.0, %v1234
  %v1236 = vmul.f32 %v1233, %v1235
  %v1237 = vadd.f32 %v1233, %v1236
  %vm1238 = vweird.f32 %v1232
  %vm1239 = vweird.f32 %v1233
  %vm1240 = vmor %vm1238, %vm1239
  %v1241 = vsel %vm1240, %v1233, %v1237
  %v1242 = vand.u32 2147483647, %v1232
  %vm1243 = vcmp.eq.f32.partialorder %v1242, 8.507059e+37
  %v1244 = vand.u32 %v1232, 2147483648
  %v1245 = vor.u32 1.1754944e-38, %v1244
  %v1246 = vsel %vm1243, %v1245, %v1241
  %v1247 = vmul.f32 1.0, %v1246
  %v1248 = vmul.f32 %v1247, 2.0
  %v1249 = vsub.f32 %v1248, 1.0
  %v1250 = vmul.f32 %v1247, %v1132
  %1252 = vrot.lane.b32.xlu0 %v1249, 64
  %v1253 = vpop.permute.xlu0 %1252
  %v1255 = vmul.f32 %v1247, %v1253
  %1257 = vrot.lane.b32.xlu0 %v1255, 32
  %v1258 = vpop.permute.xlu0 %1257
  %v1260 = vadd.f32 %v1250, %v1258
  %v1261 = vtanh.pop %v1260
  %1263 = vrot.lane.b32.xlu0 %v1261, 64
  %v1264 = vpop.permute.xlu0 %1263
  %v1266 = vmul.f32 %v1247, %v1264
  %v1267 = vld [vmem:[%s6] sm:$0x1]
  %v1269 = vperm.slane %v1267, 0
  %1270 = vrot.lane.b32.xlu0 %v1269, 96
  %v1271 = vpop.permute.xlu0 %1270
  %v1273 = vmul.f32 %v1266, %v1271
  %1275 = vrot.lane.b32.xlu0 %v1273, 32
  %v1276 = vpop.permute.xlu0 %1275
  %v1278 = vsel %vm169, %v1276, 0.0
  %1279 = vadd.xlane.f32.xlu0 %v1278
  %v1280 = vpop.xlane.xlu0 %1279
  %v1281 = vld [vmem:[#allocation2] sm:$0x1]
  %v1283 = vperm.slane %v1281, 0
  %v1285 = vadd.f32 %v1280, %v1283
  %vm1286 = vcmask 7168
  %1287 = vst.msk [vmem:[%s8] sm:$0xff] %vm1286, %v1285
  // Predicated region
  $region34: #{_lstm_model_forward_impl.1} parent=0 // pred_check
    _
  $region35: #{_lstm_model_forward_impl.1} parent=0 // pred_check_branch
    %1289 = sbr.rel (0) target = $region37
  $region36: #{_lstm_model_forward_impl.1} parent=0 // pred_region
    _
  $region37: #{_lstm_model_forward_impl.1} parent=0 // pred_fallthru
    _
  // Predicated region
  $region38: #{_lstm_model_forward_impl.1} parent=0 // pred_check
    _
  $region39: #{_lstm_model_forward_impl.1} parent=0 // pred_check_branch
    %1291 = sbr.rel (0) target = $region41
  $region40: #{_lstm_model_forward_impl.1} parent=0 // pred_region
    _
  $region41: #{_lstm_model_forward_impl.1} parent=0 // pred_fallthru
    _

</llo_original>
